<compile_context>
chip_gen: v6e
topology: v6e:2x2x1
jax: 0.10.0
libtpu: 0.0.40
codegen_flags: <defaults>
</compile_context>

<pallas_src>
import functools

import jax
import jax.numpy as jnp
import numpy as np
from jax.experimental import pallas as pl
from jax.experimental.pallas import tpu as pltpu


def _round_up(x, m):
    return ((x + m - 1) // m) * m


def _build_cols(x, m_ref, col_ref, *, k, H, W, row_pitch):
    """Write the k*k shifted+masked taps of x into the im2col VMEM scratch.

    x:       (Cin, H*W) value (one batch element, channels on sublanes).
    m_ref:   (k*k, H*W) per-tap padding-validity masks (0/1).
    col_ref: (k*k*row_pitch, H*W) VMEM scratch; tap t occupies rows
             [t*row_pitch, t*row_pitch + Cin), pad rows are zero.
    """
    HW = H * W
    pad = k // 2
    cin = x.shape[0]
    zero_rows = row_pitch - cin
    for kh in range(k):
        for kw in range(k):
            tap = kh * k + kw
            shift = (kh - pad) * W + (kw - pad)
            if shift == 0:
                xs = x                                     # centre tap: no shift/mask
            else:
                # xs[ci, p] = x[ci, p + shift]; wrapped / out-of-image positions are
                # zeroed by the mask (this implements the zero padding without ever
                # materializing a padded x in HBM).
                xs = jnp.roll(x, -shift, axis=1) * m_ref[pl.ds(tap, 1), :]
            if zero_rows:
                # Keep the store sublane-aligned: pad the tap slab up to row_pitch.
                xs = jnp.concatenate(
                    [xs, jnp.zeros((zero_rows, HW), xs.dtype)], axis=0)
            col_ref[pl.ds(tap * row_pitch, row_pitch), :] = xs


def _conv2d_fused_kernel(x_ref, w_ref, b_ref, m_ref, o_ref, col_ref, *,
                         k, H, W, row_pitch, hoist_cols):
    """im2col conv: one (Cout_t, k*k*row_pitch) x (k*k*row_pitch, H*W) MXU matmul.

    x_ref: (1, Cin, H*W)                  w_ref: (Cout_t, k*k*row_pitch)
    b_ref: (Cout_t, 1)                    m_ref: (k*k, H*W)
    o_ref: (1, Cout_t, H*W)               col_ref: (k*k*row_pitch, H*W) VMEM scratch
    """
    def build():
        _build_cols(x_ref[0], m_ref, col_ref, k=k, H=H, W=W, row_pitch=row_pitch)

    if hoist_cols:
        # grid = (N, n_co) with the Cout-tile axis fastest: the im2col scratch only
        # depends on the batch index -> build once per batch element, reuse for all
        # Cout tiles (saves (n_co-1)/n_co of the XLU roll + VPU mask work).
        @pl.when(pl.program_id(1) == 0)
        def _():
            build()
    else:
        build()

    acc = jax.lax.dot_general(
        w_ref[...], col_ref[...],
        dimension_numbers=(((1,), (0,)), ((), ())),
        preferred_element_type=jnp.float32,
        precision=jax.lax.Precision.HIGHEST,
    )
    o_ref[0] = (acc + b_ref[...]).astype(o_ref.dtype)


def _conv2d_pertap_kernel(x_ref, w_ref, b_ref, m_ref, o_ref, *, k, H, W):
    """Fallback: k*k accumulated (Cout_t, Cin) x (Cin, H*W) matmuls (no im2col scratch).

    w_ref: (k*k, Cout_t, Cin); everything else as in the fused kernel.
    """
    HW = H * W
    pad = k // 2
    x = x_ref[0]                                           # (Cin, HW)
    acc = jnp.zeros(o_ref.shape[1:], jnp.float32)          # (Cout_t, HW)
    for kh in range(k):
        for kw in range(k):
            tap = kh * k + kw
            shift = (kh - pad) * W + (kw - pad)
            if shift == 0:
                xs = x
            else:
                xs = jnp.roll(x, -shift, axis=1) * m_ref[pl.ds(tap, 1), :]
            acc += jax.lax.dot_general(
                w_ref[tap], xs,
                dimension_numbers=(((1,), (0,)), ((), ())),
                preferred_element_type=jnp.float32,
                precision=jax.lax.Precision.HIGHEST,
            )
    o_ref[0] = (acc + b_ref[...]).astype(o_ref.dtype)


def conv2d_layer_forward(x_nchw, weight_oihw, bias, *, kernel_size, gain=1.0,
                         activation="linear", cout_tile=None, fuse=None,
                         compute_dtype=None,
                         vmem_budget_bytes=48 * 1024 * 1024):
    """Pallas implementation of Conv2dLayer.forward for up=down=1, 'linear', no clamp."""
    assert activation == "linear", "only the default 'linear' activation is implemented"
    assert kernel_size % 2 == 1, "pad = k//2 output-shape identity only holds for odd k"

    N, Cin, H, W = x_nchw.shape
    Cout = weight_oihw.shape[0]
    k = kernel_size
    HW = H * W
    pad = k // 2
    out_dtype = x_nchw.dtype
    dtype = jnp.dtype(compute_dtype if compute_dtype is not None else out_dtype)
    itemsize = dtype.itemsize

    weight_gain = 1.0 / np.sqrt(Cin * k * k)
    act_gain = 1.0 * float(gain)                 # def_gain for 'linear' is 1.0

    if bias is None:
        bias = jnp.zeros((Cout,), dtype)

    row_pitch = _round_up(Cin, 8)                # sublane-aligned per-tap row pitch

    # ---- cout_tile / fused-vs-per-tap selection from a v7x-safe VMEM budget ----
    def vmem_estimate(ct, fused):
        x_blk = Cin * HW * itemsize
        o_blk = ct * HW * jnp.dtype(out_dtype).itemsize
        m_blk = k * k * HW * itemsize
        b_blk = ct * itemsize
        if fused:
            w_blk = ct * k * k * row_pitch * itemsize
            scratch = k * k * row_pitch * HW * itemsize
        else:
            w_blk = k * k * ct * Cin * itemsize
            scratch = 0
        acc = ct * HW * 4                        # f32 matmul result / accumulator
        # double-buffered pipelined blocks + persistent scratch + accumulator
        return 2 * (x_blk + w_blk + o_blk + m_blk + b_blk) + scratch + acc

    # Cout-tile candidates: divisors of Cout whose blocks obey the (8,128) rule
    # (sublane dim either 8-aligned or the full dim).
    divisors = [d for d in range(1, Cout + 1) if Cout % d == 0]
    candidates = sorted([d for d in divisors if d == Cout or d % 8 == 0], reverse=True)
    if cout_tile is not None:
        assert Cout % cout_tile == 0, "cout_tile must divide Cout"
        assert cout_tile == Cout or cout_tile % 8 == 0, "cout_tile must be 8-aligned"
        candidates = [cout_tile]

    chosen, use_fused = None, False
    if fuse is None or fuse:
        for d in candidates:                     # prefer the fused im2col path
            if vmem_estimate(d, True) <= vmem_budget_bytes:
                chosen, use_fused = d, True
                break
    if chosen is None and (fuse is None or not fuse):
        for d in candidates:                     # per-tap fallback (smaller footprint)
            if vmem_estimate(d, False) <= vmem_budget_bytes:
                chosen, use_fused = d, False
                break
    if chosen is None:
        # TODO(synk): spatial tiling with halo rows would be needed here; best effort.
        chosen, use_fused = candidates[-1], False
    cout_tile = chosen
    n_co = Cout // cout_tile

    # ---- grid ordering: minimize redundant HBM traffic --------------------------
    w_total_bytes = Cout * k * k * Cin * itemsize
    x_blk_bytes = Cin * HW * itemsize
    redundant_c_fast = (N - 1) * w_total_bytes if n_co > 1 else 0   # weights re-fetched / batch
    redundant_n_fast = (n_co - 1) * N * x_blk_bytes                 # activations re-fetched / tile
    c_fastest = (n_co == 1) or (redundant_c_fast <= redundant_n_fast)
    hoist_cols = use_fused and c_fastest and n_co > 1

    # ---- tiny host-side parameter prep (weights / bias / masks are small) -------
    w_scaled = weight_oihw.astype(jnp.float32) * (weight_gain * act_gain)
    if use_fused:
        # OIHW -> (Cout, k, k, Cin) -> zero-pad Cin to row_pitch -> (Cout, k*k*row_pitch)
        w_f = jnp.transpose(w_scaled, (0, 2, 3, 1))
        if row_pitch != Cin:
            w_f = jnp.pad(w_f, ((0, 0), (0, 0), (0, 0), (0, row_pitch - Cin)))
        w = w_f.reshape(Cout, k * k * row_pitch).astype(dtype)
    else:
        # OIHW -> (k*k, Cout, Cin) for the per-tap loop.
        w = jnp.transpose(w_scaled, (2, 3, 0, 1)).reshape(k * k, Cout, Cin).astype(dtype)
    b = (bias.astype(jnp.float32) * act_gain).astype(dtype).reshape(Cout, 1)

    # Per-tap validity masks implementing zero padding (replaces jnp.pad of x).
    pos = np.arange(HW)
    prow, pcol = pos // W, pos % W
    masks_np = np.zeros((k * k, HW), dtype=np.float32)
    for kh in range(k):
        for kw in range(k):
            dh, dw = kh - pad, kw - pad
            masks_np[kh * k + kw] = ((prow + dh >= 0) & (prow + dh < H) &
                                     (pcol + dw >= 0) & (pcol + dw < W))
    masks = jnp.asarray(masks_np, dtype=dtype)

    # Activations: free reshape only — stay channels-first, no pad, no transpose.
    x = x_nchw.reshape(N, Cin, HW).astype(dtype)

    # ---- grid / specs ------------------------------------------------------------
    if c_fastest:
        grid = (N, n_co)
        x_map = lambda n, c: (n, 0, 0)
        b_map = lambda n, c: (c, 0)
        m_map = lambda n, c: (0, 0)
        o_map = lambda n, c: (n, c, 0)
        wf_map = lambda n, c: (c, 0)
        wt_map = lambda n, c: (0, c, 0)
        # Hoisting carries the im2col scratch across the Cout-tile axis -> keep that
        # axis sequential; the batch axis stays parallel for megacore sharding.
        dim_sem = ("parallel", "arbitrary") if hoist_cols else ("parallel", "parallel")
    else:
        grid = (n_co, N)
        x_map = lambda c, n: (n, 0, 0)
        b_map = lambda c, n: (c, 0)
        m_map = lambda c, n: (0, 0)
        o_map = lambda c, n: (n, c, 0)
        wf_map = lambda c, n: (c, 0)
        wt_map = lambda c, n: (0, c, 0)
        dim_sem = ("parallel", "parallel")

    if use_fused:
        kernel = functools.partial(_conv2d_fused_kernel, k=k, H=H, W=W,
                                   row_pitch=row_pitch, hoist_cols=hoist_cols)
        in_specs = [
            pl.BlockSpec((1, Cin, HW), x_map),
            pl.BlockSpec((cout_tile, k * k * row_pitch), wf_map),
            pl.BlockSpec((cout_tile, 1), b_map),
            pl.BlockSpec((k * k, HW), m_map),
        ]
        scratch_shapes = [pltpu.VMEM((k * k * row_pitch, HW), dtype)]
    else:
        kernel = functools.partial(_conv2d_pertap_kernel, k=k, H=H, W=W)
        in_specs = [
            pl.BlockSpec((1, Cin, HW), x_map),
            pl.BlockSpec((k * k, cout_tile, Cin), wt_map),
            pl.BlockSpec((cout_tile, 1), b_map),
            pl.BlockSpec((k * k, HW), m_map),
        ]
        scratch_shapes = []

    est = vmem_estimate(cout_tile, use_fused)
    vmem_limit = int(min(max(int(1.5 * est), 16 * 1024 * 1024), 64 * 1024 * 1024))

    out = pl.pallas_call(
        kernel,
        out_shape=jax.ShapeDtypeStruct((N, Cout, HW), out_dtype),
        grid_spec=pltpu.PrefetchScalarGridSpec(
            num_scalar_prefetch=0,
            grid=grid,
            in_specs=in_specs,
            out_specs=pl.BlockSpec((1, cout_tile, HW), o_map),
            scratch_shapes=scratch_shapes,
        ),
        compiler_params=pltpu.CompilerParams(
            dimension_semantics=dim_sem,
            vmem_limit_bytes=vmem_limit,
        ),
    )(x, w, b, masks)

    return out.reshape(N, Cout, H, W)            # free reshape; output already NCHW


def _reference(x, weight, bias, k, gain=1.0):
    """Same semantics as F.conv2d(padding=k//2) + bias, then the 'linear' gain."""
    cin = x.shape[1]
    wg = 1.0 / np.sqrt(cin * k * k)
    y = jax.lax.conv_general_dilated(
        x, weight * wg, window_strides=(1, 1),
        padding=[(k // 2, k // 2)] * 2,
        dimension_numbers=("NCHW", "OIHW", "NCHW"),
        precision=jax.lax.Precision.HIGHEST,
    )
    return (y + bias.reshape(1, -1, 1, 1)) * gain


if __name__ == "__main__":
    key = jax.random.PRNGKey(0)

    def run_case(N, Cin, Cout, k, H, W, **kwargs):
        kk = jax.random.fold_in(key, N * 100000 + Cout * 100 + H)
        kx, kw_, kb = jax.random.split(kk, 3)
        x = jax.random.normal(kx, (N, Cin, H, W), dtype=jnp.float32)
        weight = jax.random.normal(kw_, (Cout, Cin, k, k), dtype=jnp.float32)
        bias = 0.1 * jax.random.normal(kb, (Cout,), dtype=jnp.float32)
        y = jax.block_until_ready(
            conv2d_layer_forward(x, weight, bias, kernel_size=k, gain=1.0, **kwargs))
        y_ref = jax.block_until_ready(_reference(x, weight, bias, k))
        np.testing.assert_allclose(np.asarray(y), np.asarray(y_ref),
                                   rtol=1e-5, atol=2e-5)

    # Default config: fused im2col path, single Cout tile.
    run_case(N=2, Cin=4, Cout=8, k=3, H=16, W=16)
    # Multi-Cout-tile config: exercises the hoisted im2col build + grid-order choice.
    run_case(N=2, Cin=4, Cout=16, k=3, H=16, W=16, cout_tile=8)
    # Per-tap fallback path (used when the im2col scratch would not fit VMEM).
    run_case(N=2, Cin=4, Cout=8, k=3, H=16, W=16, fuse=False)

    print("KERNEL_OK")
</pallas_src>

<mosaic_0001>
module attributes {stable_mosaic.version = 11 : i64} {
  func.func @_conv2d_fused_kernel(%arg0: i32, %arg1: i32, %arg2: memref<1x4x256xf32, #tpu.memory_space<vmem>>, %arg3: memref<8x72xf32, #tpu.memory_space<vmem>>, %arg4: memref<8x1xf32, #tpu.memory_space<vmem>>, %arg5: memref<9x256xf32, #tpu.memory_space<vmem>>, %arg6: memref<1x8x256xf32, #tpu.memory_space<vmem>>, %arg7: memref<72x256xf32, #tpu.memory_space<vmem>>) attributes {dimension_semantics = [#tpu.dimension_semantics<parallel>, #tpu.dimension_semantics<parallel>], iteration_bounds = array<i64: 2, 1>, scalar_prefetch = 0 : i64, scratch_operands = 1 : i64, tpu.core_type = #tpu.core_type<tc>, window_params = [{transform_indices = @transform_0, window_bounds = array<i64: 1, 4, 256>}, {transform_indices = @transform_1, window_bounds = array<i64: 8, 72>}, {transform_indices = @transform_2, window_bounds = array<i64: 8, 1>}, {pipeline_mode = #tpu.pipeline_mode<synchronous>, transform_indices = @transform_3, window_bounds = array<i64: 9, 256>}, {transform_indices = @transform_4, window_bounds = array<i64: 1, 8, 256>}]} {
    %c0 = arith.constant 0 : index
    %c0_0 = arith.constant 0 : index
    %c0_1 = arith.constant 0 : index
    %0 = vector.load %arg2[%c0, %c0_0, %c0_1] : memref<1x4x256xf32, #tpu.memory_space<vmem>>, vector<1x4x256xf32>
    %1 = vector.shape_cast %0 : vector<1x4x256xf32> to vector<4x256xf32>
    %2 = vector.extract_strided_slice %1 {offsets = [0, 239], sizes = [4, 17], strides = [1, 1]} : vector<4x256xf32> to vector<4x17xf32>
    %3 = vector.extract_strided_slice %1 {offsets = [0, 0], sizes = [4, 239], strides = [1, 1]} : vector<4x256xf32> to vector<4x239xf32>
    %4 = tpu.concatenate %2, %3 in 1 : vector<4x17xf32>, vector<4x239xf32> -> vector<4x256xf32>
    %c0_2 = arith.constant 0 : index
    %c0_3 = arith.constant 0 : index
    %5 = vector.load %arg5[%c0_2, %c0_3] : memref<9x256xf32, #tpu.memory_space<vmem>>, vector<1x256xf32>
    %6 = vector.broadcast %5 : vector<1x256xf32> to vector<4x256xf32>
    %7 = arith.mulf %4, %6 : vector<4x256xf32>
    %cst = arith.constant 0.000000e+00 : f32
    %8 = vector.broadcast %cst : f32 to vector<4x256xf32>
    %9 = tpu.concatenate %7, %8 in 0 : vector<4x256xf32>, vector<4x256xf32> -> vector<8x256xf32>
    %c0_4 = arith.constant 0 : index
    %c0_5 = arith.constant 0 : index
    %10 = vector.load %arg7[%c0_4, %c0_5] : memref<72x256xf32, #tpu.memory_space<vmem>>, vector<8x256xf32>
    tpu.vector_store %arg7[%c0_4, %c0_5], %9 {strides = array<i32>} : memref<72x256xf32, #tpu.memory_space<vmem>>, vector<8x256xf32>,
    %11 = vector.extract_strided_slice %1 {offsets = [0, 240], sizes = [4, 16], strides = [1, 1]} : vector<4x256xf32> to vector<4x16xf32>
    %12 = vector.extract_strided_slice %1 {offsets = [0, 0], sizes = [4, 240], strides = [1, 1]} : vector<4x256xf32> to vector<4x240xf32>
    %13 = tpu.concatenate %11, %12 in 1 : vector<4x16xf32>, vector<4x240xf32> -> vector<4x256xf32>
    %c1 = arith.constant 1 : index
    %c0_6 = arith.constant 0 : index
    %14 = vector.load %arg5[%c1, %c0_6] : memref<9x256xf32, #tpu.memory_space<vmem>>, vector<1x256xf32>
    %15 = vector.broadcast %14 : vector<1x256xf32> to vector<4x256xf32>
    %16 = arith.mulf %13, %15 : vector<4x256xf32>
    %cst_7 = arith.constant 0.000000e+00 : f32
    %17 = vector.broadcast %cst_7 : f32 to vector<4x256xf32>
    %18 = tpu.concatenate %16, %17 in 0 : vector<4x256xf32>, vector<4x256xf32> -> vector<8x256xf32>
    %c8 = arith.constant 8 : index
    %c0_8 = arith.constant 0 : index
    %19 = vector.load %arg7[%c8, %c0_8] : memref<72x256xf32, #tpu.memory_space<vmem>>, vector<8x256xf32>
    tpu.vector_store %arg7[%c8, %c0_8], %18 {strides = array<i32>} : memref<72x256xf32, #tpu.memory_space<vmem>>, vector<8x256xf32>,
    %20 = vector.extract_strided_slice %1 {offsets = [0, 241], sizes = [4, 15], strides = [1, 1]} : vector<4x256xf32> to vector<4x15xf32>
    %21 = vector.extract_strided_slice %1 {offsets = [0, 0], sizes = [4, 241], strides = [1, 1]} : vector<4x256xf32> to vector<4x241xf32>
    %22 = tpu.concatenate %20, %21 in 1 : vector<4x15xf32>, vector<4x241xf32> -> vector<4x256xf32>
    %c2 = arith.constant 2 : index
    %c0_9 = arith.constant 0 : index
    %23 = vector.load %arg5[%c2, %c0_9] : memref<9x256xf32, #tpu.memory_space<vmem>>, vector<1x256xf32>
    %24 = vector.broadcast %23 : vector<1x256xf32> to vector<4x256xf32>
    %25 = arith.mulf %22, %24 : vector<4x256xf32>
    %cst_10 = arith.constant 0.000000e+00 : f32
    %26 = vector.broadcast %cst_10 : f32 to vector<4x256xf32>
    %27 = tpu.concatenate %25, %26 in 0 : vector<4x256xf32>, vector<4x256xf32> -> vector<8x256xf32>
    %c16 = arith.constant 16 : index
    %c0_11 = arith.constant 0 : index
    %28 = vector.load %arg7[%c16, %c0_11] : memref<72x256xf32, #tpu.memory_space<vmem>>, vector<8x256xf32>
    tpu.vector_store %arg7[%c16, %c0_11], %27 {strides = array<i32>} : memref<72x256xf32, #tpu.memory_space<vmem>>, vector<8x256xf32>,
    %29 = vector.extract_strided_slice %1 {offsets = [0, 255], sizes = [4, 1], strides = [1, 1]} : vector<4x256xf32> to vector<4x1xf32>
    %30 = vector.extract_strided_slice %1 {offsets = [0, 0], sizes = [4, 255], strides = [1, 1]} : vector<4x256xf32> to vector<4x255xf32>
    %31 = tpu.concatenate %29, %30 in 1 : vector<4x1xf32>, vector<4x255xf32> -> vector<4x256xf32>
    %c3 = arith.constant 3 : index
    %c0_12 = arith.constant 0 : index
    %32 = vector.load %arg5[%c3, %c0_12] : memref<9x256xf32, #tpu.memory_space<vmem>>, vector<1x256xf32>
    %33 = vector.broadcast %32 : vector<1x256xf32> to vector<4x256xf32>
    %34 = arith.mulf %31, %33 : vector<4x256xf32>
    %cst_13 = arith.constant 0.000000e+00 : f32
    %35 = vector.broadcast %cst_13 : f32 to vector<4x256xf32>
    %36 = tpu.concatenate %34, %35 in 0 : vector<4x256xf32>, vector<4x256xf32> -> vector<8x256xf32>
    %c24 = arith.constant 24 : index
    %c0_14 = arith.constant 0 : index
    %37 = vector.load %arg7[%c24, %c0_14] : memref<72x256xf32, #tpu.memory_space<vmem>>, vector<8x256xf32>
    tpu.vector_store %arg7[%c24, %c0_14], %36 {strides = array<i32>} : memref<72x256xf32, #tpu.memory_space<vmem>>, vector<8x256xf32>,
    %cst_15 = arith.constant 0.000000e+00 : f32
    %38 = vector.broadcast %cst_15 : f32 to vector<4x256xf32>
    %39 = tpu.concatenate %1, %38 in 0 : vector<4x256xf32>, vector<4x256xf32> -> vector<8x256xf32>
    %c32 = arith.constant 32 : index
    %c0_16 = arith.constant 0 : index
    %40 = vector.load %arg7[%c32, %c0_16] : memref<72x256xf32, #tpu.memory_space<vmem>>, vector<8x256xf32>
    tpu.vector_store %arg7[%c32, %c0_16], %39 {strides = array<i32>} : memref<72x256xf32, #tpu.memory_space<vmem>>, vector<8x256xf32>,
    %41 = vector.extract_strided_slice %1 {offsets = [0, 1], sizes = [4, 255], strides = [1, 1]} : vector<4x256xf32> to vector<4x255xf32>
    %42 = vector.extract_strided_slice %1 {offsets = [0, 0], sizes = [4, 1], strides = [1, 1]} : vector<4x256xf32> to vector<4x1xf32>
    %43 = tpu.concatenate %41, %42 in 1 : vector<4x255xf32>, vector<4x1xf32> -> vector<4x256xf32>
    %c5 = arith.constant 5 : index
    %c0_17 = arith.constant 0 : index
    %44 = vector.load %arg5[%c5, %c0_17] : memref<9x256xf32, #tpu.memory_space<vmem>>, vector<1x256xf32>
    %45 = vector.broadcast %44 : vector<1x256xf32> to vector<4x256xf32>
    %46 = arith.mulf %43, %45 : vector<4x256xf32>
    %cst_18 = arith.constant 0.000000e+00 : f32
    %47 = vector.broadcast %cst_18 : f32 to vector<4x256xf32>
    %48 = tpu.concatenate %46, %47 in 0 : vector<4x256xf32>, vector<4x256xf32> -> vector<8x256xf32>
    %c40 = arith.constant 40 : index
    %c0_19 = arith.constant 0 : index
    %49 = vector.load %arg7[%c40, %c0_19] : memref<72x256xf32, #tpu.memory_space<vmem>>, vector<8x256xf32>
    tpu.vector_store %arg7[%c40, %c0_19], %48 {strides = array<i32>} : memref<72x256xf32, #tpu.memory_space<vmem>>, vector<8x256xf32>,
    %50 = vector.extract_strided_slice %1 {offsets = [0, 15], sizes = [4, 241], strides = [1, 1]} : vector<4x256xf32> to vector<4x241xf32>
    %51 = vector.extract_strided_slice %1 {offsets = [0, 0], sizes = [4, 15], strides = [1, 1]} : vector<4x256xf32> to vector<4x15xf32>
    %52 = tpu.concatenate %50, %51 in 1 : vector<4x241xf32>, vector<4x15xf32> -> vector<4x256xf32>
    %c6 = arith.constant 6 : index
    %c0_20 = arith.constant 0 : index
    %53 = vector.load %arg5[%c6, %c0_20] : memref<9x256xf32, #tpu.memory_space<vmem>>, vector<1x256xf32>
    %54 = vector.broadcast %53 : vector<1x256xf32> to vector<4x256xf32>
    %55 = arith.mulf %52, %54 : vector<4x256xf32>
    %cst_21 = arith.constant 0.000000e+00 : f32
    %56 = vector.broadcast %cst_21 : f32 to vector<4x256xf32>
    %57 = tpu.concatenate %55, %56 in 0 : vector<4x256xf32>, vector<4x256xf32> -> vector<8x256xf32>
    %c48 = arith.constant 48 : index
    %c0_22 = arith.constant 0 : index
    %58 = vector.load %arg7[%c48, %c0_22] : memref<72x256xf32, #tpu.memory_space<vmem>>, vector<8x256xf32>
    tpu.vector_store %arg7[%c48, %c0_22], %57 {strides = array<i32>} : memref<72x256xf32, #tpu.memory_space<vmem>>, vector<8x256xf32>,
    %59 = vector.extract_strided_slice %1 {offsets = [0, 16], sizes = [4, 240], strides = [1, 1]} : vector<4x256xf32> to vector<4x240xf32>
    %60 = vector.extract_strided_slice %1 {offsets = [0, 0], sizes = [4, 16], strides = [1, 1]} : vector<4x256xf32> to vector<4x16xf32>
    %61 = tpu.concatenate %59, %60 in 1 : vector<4x240xf32>, vector<4x16xf32> -> vector<4x256xf32>
    %c7 = arith.constant 7 : index
    %c0_23 = arith.constant 0 : index
    %62 = vector.load %arg5[%c7, %c0_23] : memref<9x256xf32, #tpu.memory_space<vmem>>, vector<1x256xf32>
    %63 = vector.broadcast %62 : vector<1x256xf32> to vector<4x256xf32>
    %64 = arith.mulf %61, %63 : vector<4x256xf32>
    %cst_24 = arith.constant 0.000000e+00 : f32
    %65 = vector.broadcast %cst_24 : f32 to vector<4x256xf32>
    %66 = tpu.concatenate %64, %65 in 0 : vector<4x256xf32>, vector<4x256xf32> -> vector<8x256xf32>
    %c56 = arith.constant 56 : index
    %c0_25 = arith.constant 0 : index
    %67 = vector.load %arg7[%c56, %c0_25] : memref<72x256xf32, #tpu.memory_space<vmem>>, vector<8x256xf32>
    tpu.vector_store %arg7[%c56, %c0_25], %66 {strides = array<i32>} : memref<72x256xf32, #tpu.memory_space<vmem>>, vector<8x256xf32>,
    %68 = vector.extract_strided_slice %1 {offsets = [0, 17], sizes = [4, 239], strides = [1, 1]} : vector<4x256xf32> to vector<4x239xf32>
    %69 = vector.extract_strided_slice %1 {offsets = [0, 0], sizes = [4, 17], strides = [1, 1]} : vector<4x256xf32> to vector<4x17xf32>
    %70 = tpu.concatenate %68, %69 in 1 : vector<4x239xf32>, vector<4x17xf32> -> vector<4x256xf32>
    %c8_26 = arith.constant 8 : index
    %c0_27 = arith.constant 0 : index
    %71 = vector.load %arg5[%c8_26, %c0_27] : memref<9x256xf32, #tpu.memory_space<vmem>>, vector<1x256xf32>
    %72 = vector.broadcast %71 : vector<1x256xf32> to vector<4x256xf32>
    %73 = arith.mulf %70, %72 : vector<4x256xf32>
    %cst_28 = arith.constant 0.000000e+00 : f32
    %74 = vector.broadcast %cst_28 : f32 to vector<4x256xf32>
    %75 = tpu.concatenate %73, %74 in 0 : vector<4x256xf32>, vector<4x256xf32> -> vector<8x256xf32>
    %c64 = arith.constant 64 : index
    %c0_29 = arith.constant 0 : index
    %76 = vector.load %arg7[%c64, %c0_29] : memref<72x256xf32, #tpu.memory_space<vmem>>, vector<8x256xf32>
    tpu.vector_store %arg7[%c64, %c0_29], %75 {strides = array<i32>} : memref<72x256xf32, #tpu.memory_space<vmem>>, vector<8x256xf32>,
    %c0_30 = arith.constant 0 : index
    %c0_31 = arith.constant 0 : index
    %77 = vector.load %arg3[%c0_30, %c0_31] : memref<8x72xf32, #tpu.memory_space<vmem>>, vector<8x72xf32>
    %c0_32 = arith.constant 0 : index
    %c0_33 = arith.constant 0 : index
    %78 = vector.load %arg7[%c0_32, %c0_33] : memref<72x256xf32, #tpu.memory_space<vmem>>, vector<72x256xf32>
    %cst_34 = arith.constant dense<0.000000e+00> : vector<8x256xf32>
    %79 = tpu.matmul %77, %78, %cst_34 {dimension_numbers = #tpu.dot_dimension_numbers<[1], [0], [0], [1], [0, 0, 1, 1], [], []>, precision = #tpu.contract_precision<fp32>} : vector<8x72xf32>, vector<72x256xf32>, vector<8x256xf32> -> vector<8x256xf32>
    %c0_35 = arith.constant 0 : index
    %c0_36 = arith.constant 0 : index
    %80 = vector.load %arg4[%c0_35, %c0_36] : memref<8x1xf32, #tpu.memory_space<vmem>>, vector<8x1xf32>
    %81 = vector.broadcast %80 : vector<8x1xf32> to vector<8x256xf32>
    %82 = arith.addf %79, %81 : vector<8x256xf32>
    %c0_37 = arith.constant 0 : index
    %c0_38 = arith.constant 0 : index
    %c0_39 = arith.constant 0 : index
    %83 = vector.load %arg6[%c0_37, %c0_38, %c0_39] : memref<1x8x256xf32, #tpu.memory_space<vmem>>, vector<1x8x256xf32>
    %84 = vector.shape_cast %83 : vector<1x8x256xf32> to vector<8x256xf32>
    %85 = vector.shape_cast %82 : vector<8x256xf32> to vector<1x8x256xf32>
    tpu.vector_store %arg6[%c0_37, %c0_38, %c0_39], %85 {strides = array<i32>} : memref<1x8x256xf32, #tpu.memory_space<vmem>>, vector<1x8x256xf32>,
    return
  }
  func.func @transform_0(%arg0: i32, %arg1: i32) -> (i32, i32, i32) {
    %c0_i32 = arith.constant 0 : i32
    %c0_i32_0 = arith.constant 0 : i32
    %c0_i32_1 = arith.constant 0 : i32
    return %arg0, %c0_i32, %c0_i32_0 : i32, i32, i32
  }
  func.func @transform_1(%arg0: i32, %arg1: i32) -> (i32, i32) {
    %c0_i32 = arith.constant 0 : i32
    %c0_i32_0 = arith.constant 0 : i32
    return %arg1, %c0_i32 : i32, i32
  }
  func.func @transform_2(%arg0: i32, %arg1: i32) -> (i32, i32) {
    %c0_i32 = arith.constant 0 : i32
    %c0_i32_0 = arith.constant 0 : i32
    return %arg1, %c0_i32 : i32, i32
  }
  func.func @transform_3(%arg0: i32, %arg1: i32) -> (i32, i32) {
    %c0_i32 = arith.constant 0 : i32
    %c0_i32_0 = arith.constant 0 : i32
    %c0_i32_1 = arith.constant 0 : i32
    return %c0_i32, %c0_i32_0 : i32, i32
  }
  func.func @transform_4(%arg0: i32, %arg1: i32) -> (i32, i32, i32) {
    %c0_i32 = arith.constant 0 : i32
    %c0_i32_0 = arith.constant 0 : i32
    return %arg0, %arg1, %c0_i32 : i32, i32, i32
  }
}

</mosaic_0001>

<llo_original>
// kernel: tpu_custom_call.1
$region0: #{tpu_custom_call.1}
  #allocation0 [shape = 'u32[]', space=smem, size = 0x4, offset = 0x4, fixed_abs, tag = 'smem constant byte address 0x4 - core index']
  #allocation1 [shape = 'u32[144,128]{1,0:T(1,128)}', space=vmem, size = 0x12000, scoped, tag = 'internal scratch']
  #allocation2 [shape = 'f32[72,256]{1,0:T(8,128)}', space=vmem, size = 0x12000, scoped, tag = 'scratch operand']
  %s0 = inlined_call_operand.hbm [shape: f32[2,4,256], index: 0, kind: input, shape index: {}]
  %s1 = inlined_call_operand.vmem [shape: f32[8,72], index: 1, kind: input, shape index: {}]
  %s2 = inlined_call_operand.vmem [shape: f32[8,1], index: 2, kind: input, shape index: {}]
  %s3 = inlined_call_operand.hbm [shape: f32[9,256], index: 3, kind: input, shape index: {}]
  %s4 = inlined_call_operand.hbm [shape: f32[2,8,256], index: 4, kind: output, shape index: {}]
  %s5 = sld [smem:[#allocation0]]
  $region57: #{tpu_custom_call.1} parent=0
    _
  %s7 = ssub.s32 1, %s5
  %s8 = scalar_select 0, %s7, %s5
  $region1: #{tpu_custom_call.1} parent=0
    #allocation3 [shape = 'u8[8192]{0}', space=vmem, size = 0x2000, scoped, tag = 'input window, operand 0']
    #allocation4 [shape = 's32[2]{0}', space=sflag, size = 0x8, scoped, tag = 'scoped memory for tpu_custom_call.1']
    #allocation5 [shape = 's32[2]{0}', space=sflag, size = 0x8, scoped, tag = 'scoped memory for tpu_custom_call.1']
    #allocation6 [shape = 'u8[16384]{0}', space=vmem, size = 0x4000, scoped, tag = 'input window, operand 3, single buffered']
    #allocation7 [shape = 's32[1]{0}', space=sflag, size = 0x4, scoped, tag = 'scoped memory for tpu_custom_call.1']
    #allocation8 [shape = 'u8[16384]{0}', space=vmem, size = 0x4000, scoped, tag = 'output window, operand 0']
    %9 = vsyncpa [#allocation4], 0
    %s10 = scalar_lea.sflag [#allocation4], 1
    %11 = vsyncpa %s10, 0
    %12 = vsyncpa [#allocation7], 0
    %13 = vsyncpa [#allocation5], 0
    %s14 = scalar_lea.sflag [#allocation5], 1
    %15 = vsyncpa %s14, 0
    loop: start=0, step=1, limit=4
    $region2: #{tpu_custom_call.1} parent=1 // loop_pre_header
      _
    $region3: #{tpu_custom_call.1} parent=1 // loop_header
      %s17 = sphi 0, %s21
      %p18 = scmp.ge.s32.totalorder %s17, 4
      %s24 = sphi 0, %s36
      %s25 = sphi 0, %s32
      %s26 = sphi 0, %s24
      %s27 = sphi 0, %s25
      %s28 = sphi 0, %s26
      %s29 = sphi 0, %s27
      %s39 = sphi 0, %s41
      %s42 = sphi 0, %s39
      %s43 = sphi 0, %s42
      %s59 = sphi 0, %s43
      %s65 = sphi 0, %s67
      %s68 = sphi 0, %s65
      %s69 = sphi 0, %s68
      %s85 = sphi 0, %s69
      %s91 = sphi 0, %s93
      %s94 = sphi 0, %s91
      %s95 = sphi 0, %s94
      %s111 = sphi 0, %s95
      %s115 = sphi 0, %s115
      %s117 = sphi 0, %s115
      %s118 = sphi 0, %s117
      %s132 = sphi 0, %s118
      %s140 = sphi 0, %s142
      %s143 = sphi 0, %s140
      %s144 = sphi 0, %s143
      %s160 = sphi 0, %s144
    $region4: #{tpu_custom_call.1} parent=1 // loop_header_branch
      %20 = sbr.rel (%p18) target = $region8
    $region5: #{tpu_custom_call.1} parent=1 // loop_body
      %s22 = ssub.s32 %s17, 1
      %s23 = ssub.s32 %s17, 2
      %s30 = sadd.s32 1, %s25
      %p31 = scmp.ge.s32.totalorder %s30, 1
      %s32 = scalar_select %p31, 0, %s30
      %s33 = sadd.s32 1, %s24
      %s34 = scalar_select %p31, %s33, %s24
      %p35 = scmp.ge.s32.totalorder %s34, 2
      %s36 = scalar_select %p35, 0, %s34
      %s37 = ssub.s32 %s24, %s36
      %p38 = scmp.eq.s32.totalorder %s37, 0
      %s40 = sadd.s32 %s39, 1
      %s41 = scalar_select %p38, %s39, %s40
      %p44 = pneg %p38
      %p45 = scmp.eq.s32.totalorder %s17, 1
      %p46 = por %p44, %p45
      %p47 = scmp.ne.s32.totalorder %s39, %s42
      %p48 = scmp.eq.s32.totalorder %s17, 0
      %p49 = por %p47, %p48
      %p50 = scmp.ne.s32.totalorder %s39, %s42
      %p51 = scmp.eq.s32.totalorder %s22, 1
      %p52 = por %p50, %p51
      %p53 = scmp.ne.s32.totalorder %s42, %s43
      %p54 = scmp.eq.s32.totalorder %s22, 0
      %p55 = por %p53, %p54
      %p56 = scmp.ne.s32.totalorder %s42, %s43
      %p57 = scmp.eq.s32.totalorder %s23, 1
      %p58 = por %p56, %p57
      %p60 = scmp.ne.s32.totalorder %s43, %s59
      %p61 = scmp.eq.s32.totalorder %s23, 0
      %p62 = por %p60, %p61
      %s63 = ssub.s32 %s25, %s32
      %p64 = scmp.eq.s32.totalorder %s63, 0
      %s66 = sadd.s32 %s65, 1
      %s67 = scalar_select %p64, %s65, %s66
      %p70 = pneg %p64
      %p71 = scmp.eq.s32.totalorder %s17, 1
      %p72 = por %p70, %p71
      %p73 = scmp.ne.s32.totalorder %s65, %s68
      %p74 = scmp.eq.s32.totalorder %s17, 0
      %p75 = por %p73, %p74
      %p76 = scmp.ne.s32.totalorder %s65, %s68
      %p77 = scmp.eq.s32.totalorder %s22, 1
      %p78 = por %p76, %p77
      %p79 = scmp.ne.s32.totalorder %s68, %s69
      %p80 = scmp.eq.s32.totalorder %s22, 0
      %p81 = por %p79, %p80
      %p82 = scmp.ne.s32.totalorder %s68, %s69
      %p83 = scmp.eq.s32.totalorder %s23, 1
      %p84 = por %p82, %p83
      %p86 = scmp.ne.s32.totalorder %s69, %s85
      %p87 = scmp.eq.s32.totalorder %s23, 0
      %p88 = por %p86, %p87
      %s89 = ssub.s32 %s25, %s32
      %p90 = scmp.eq.s32.totalorder %s89, 0
      %s92 = sadd.s32 %s91, 1
      %s93 = scalar_select %p90, %s91, %s92
      %p96 = pneg %p90
      %p97 = scmp.eq.s32.totalorder %s17, 1
      %p98 = por %p96, %p97
      %p99 = scmp.ne.s32.totalorder %s91, %s94
      %p100 = scmp.eq.s32.totalorder %s17, 0
      %p101 = por %p99, %p100
      %p102 = scmp.ne.s32.totalorder %s91, %s94
      %p103 = scmp.eq.s32.totalorder %s22, 1
      %p104 = por %p102, %p103
      %p105 = scmp.ne.s32.totalorder %s94, %s95
      %p106 = scmp.eq.s32.totalorder %s22, 0
      %p107 = por %p105, %p106
      %p108 = scmp.ne.s32.totalorder %s94, %s95
      %p109 = scmp.eq.s32.totalorder %s23, 1
      %p110 = por %p108, %p109
      %p112 = scmp.ne.s32.totalorder %s95, %s111
      %p113 = scmp.eq.s32.totalorder %s23, 0
      %p114 = por %p112, %p113
      %s116 = sadd.s32 %s115, 1
      %p119 = scmp.eq.s32.totalorder %s17, 1
      %p120 = scmp.ne.s32.totalorder %s115, %s117
      %p121 = scmp.eq.s32.totalorder %s17, 0
      %p122 = por %p120, %p121
      %p123 = scmp.ne.s32.totalorder %s115, %s117
      %p124 = scmp.eq.s32.totalorder %s22, 1
      %p125 = por %p123, %p124
      %p126 = scmp.ne.s32.totalorder %s117, %s118
      %p127 = scmp.eq.s32.totalorder %s22, 0
      %p128 = por %p126, %p127
      %p129 = scmp.ne.s32.totalorder %s117, %s118
      %p130 = scmp.eq.s32.totalorder %s23, 1
      %p131 = por %p129, %p130
      %p133 = scmp.ne.s32.totalorder %s118, %s132
      %p134 = scmp.eq.s32.totalorder %s23, 0
      %p135 = por %p133, %p134
      %s136 = ssub.s32 %s24, %s36
      %s137 = ssub.s32 %s25, %s32
      %s138 = sor.u32 %s136, %s137
      %p139 = scmp.eq.s32.totalorder %s138, 0
      %s141 = sadd.s32 %s140, 1
      %s142 = scalar_select %p139, %s140, %s141
      %p145 = pneg %p139
      %p146 = scmp.eq.s32.totalorder %s17, 1
      %p147 = por %p145, %p146
      %p148 = scmp.ne.s32.totalorder %s140, %s143
      %p149 = scmp.eq.s32.totalorder %s17, 0
      %p150 = por %p148, %p149
      %p151 = scmp.ne.s32.totalorder %s140, %s143
      %p152 = scmp.eq.s32.totalorder %s22, 1
      %p153 = por %p151, %p152
      %p154 = scmp.ne.s32.totalorder %s143, %s144
      %p155 = scmp.eq.s32.totalorder %s22, 0
      %p156 = por %p154, %p155
      %p157 = scmp.ne.s32.totalorder %s143, %s144
      %p158 = scmp.eq.s32.totalorder %s23, 1
      %p159 = por %p157, %p158
      %p161 = scmp.ne.s32.totalorder %s144, %s160
      %p162 = scmp.eq.s32.totalorder %s23, 0
      %p163 = por %p161, %p162
      %p164 = scmp.le.s32.totalorder 1, %s17
      %p165 = scmp.lt.s32.totalorder %s17, 3
      %p166 = pnand %p164, %p165
      %p167 = pneg %p166
      // Predicated region
      $region9: #{tpu_custom_call.1} parent=5 // pred_check
        _
      $region10: #{tpu_custom_call.1} parent=5 // pred_check_branch
        %169 = sbr.rel (%p166) target = $region12
      $region11: #{tpu_custom_call.1} parent=5 // pred_region
        %s170 = ssub.s32 %s17, 1
        // Predicated region
        $region13: #{tpu_custom_call.1} parent=11 // pred_check
          %p171 = pneg %p81
        $region14: #{tpu_custom_call.1} parent=11 // pred_check_branch
          %173 = sbr.rel (%p171) target = $region16
        $region15: #{tpu_custom_call.1} parent=11 // pred_region
          %p174 = scmp.lt.s32.totalorder %s27, 0
          %s175 = scalar_select %p174, %s27, 0
          %s176 = smul.addr %s175, 8
          %s177 = scalar_lea.vmem %s1, %s176
        $region16: #{tpu_custom_call.1} parent=11 // pred_fallthru
          _
        // Predicated region
        $region17: #{tpu_custom_call.1} parent=11 // pred_check
          %p178 = pneg %p107
        $region18: #{tpu_custom_call.1} parent=11 // pred_check_branch
          %180 = sbr.rel (%p178) target = $region20
        $region19: #{tpu_custom_call.1} parent=11 // pred_region
          %p181 = scmp.lt.s32.totalorder %s27, 0
          %s182 = scalar_select %p181, %s27, 0
          %s183 = smul.addr %s182, 8
          %s184 = scalar_lea.vmem %s2, %s183
        $region20: #{tpu_custom_call.1} parent=11 // pred_fallthru
          _
        // Predicated region
        $region21: #{tpu_custom_call.1} parent=11 // pred_check
          %p185 = pneg %p128
        $region22: #{tpu_custom_call.1} parent=11 // pred_check_branch
          %187 = sbr.rel (%p185) target = $region24
        $region23: #{tpu_custom_call.1} parent=11 // pred_region
          %s189 = ssub.s32 512, 512
          %190 = vsyncadd [#allocation7], %s189
          %s191 = sshll.u32 [#allocation6], 4
          %s192 = int_to_ptr.vmem [resolvable:$true] %s191
          %197 = dma.hbm_to_vmem [thread:$0]  %s3, 512, %s192, [#allocation7], 256, 256, 16
        $region24: #{tpu_custom_call.1} parent=11 // pred_fallthru
          _
      $region12: #{tpu_custom_call.1} parent=5 // pred_fallthru
        _
      %p198 = scmp.lt.s32.totalorder %s17, 2
      // Predicated region
      $region25: #{tpu_custom_call.1} parent=5 // pred_check
        %p199 = pneg %p198
      $region26: #{tpu_custom_call.1} parent=5 // pred_check_branch
        %201 = sbr.rel (%p199) target = $region28
      $region27: #{tpu_custom_call.1} parent=5 // pred_region
        // Predicated region
        $region29: #{tpu_custom_call.1} parent=27 // pred_check
          %p202 = pneg %p49
        $region30: #{tpu_custom_call.1} parent=27 // pred_check_branch
          %204 = sbr.rel (%p202) target = $region32
        $region31: #{tpu_custom_call.1} parent=27 // pred_region
          %s205 = sand.u32 %s39, 1
          %s206 = scalar_lea.sflag [#allocation4], %s205
          %s207 = sand.u32 %s39, 1
          %s208 = smul.addr %s207, 8
          %s209 = scalar_lea.vmem [#allocation3], %s208
          %s211 = ssub.s32 128, 128
          %212 = vsyncadd %s206, %s211
          %s213 = smul.addr %s24, 2
          %s214 = smul.addr %s213, 64
          %s215 = scalar_lea.hbm %s0, %s214
          %s217 = sshll.u32 %s209, 4
          %s218 = int_to_ptr.vmem [resolvable:$true] %s217
          %220 = dma.hbm_to_vmem [thread:$0]  %s215, 128, %s218, %s206
        $region32: #{tpu_custom_call.1} parent=27 // pred_fallthru
          _
      $region28: #{tpu_custom_call.1} parent=5 // pred_fallthru
        _
      %p221 = scmp.le.s32.totalorder 1, %s17
      %p222 = scmp.lt.s32.totalorder %s17, 3
      %p223 = pnand %p221, %p222
      %p224 = pneg %p223
      // Predicated region
      $region33: #{tpu_custom_call.1} parent=5 // pred_check
        _
      $region34: #{tpu_custom_call.1} parent=5 // pred_check_branch
        %226 = sbr.rel (%p223) target = $region36
      $region35: #{tpu_custom_call.1} parent=5 // pred_region
        %s227 = ssub.s32 %s17, 1
        %s228 = sand.u32 %s42, 1
        %s229 = scalar_lea.sflag [#allocation4], %s228
        %s230 = sand.u32 %s42, 1
        %s231 = smul.addr %s230, 8
        %s232 = scalar_lea.vmem [#allocation3], %s231
        // Predicated region
        $region37: #{tpu_custom_call.1} parent=35 // pred_check
          %p233 = pneg %p55
        $region38: #{tpu_custom_call.1} parent=35 // pred_check_branch
          %235 = sbr.rel (%p233) target = $region40
        $region39: #{tpu_custom_call.1} parent=35 // pred_region
          %236 = dma.done %s229, 128
        $region40: #{tpu_custom_call.1} parent=35 // pred_fallthru
          _
        // Predicated region
        $region41: #{tpu_custom_call.1} parent=35 // pred_check
          %p237 = pneg %p128
        $region42: #{tpu_custom_call.1} parent=35 // pred_check_branch
          %239 = sbr.rel (%p237) target = $region44
        $region43: #{tpu_custom_call.1} parent=35 // pred_region
          %240 = dma.done [#allocation7], 512
        $region44: #{tpu_custom_call.1} parent=35 // pred_fallthru
          _
        %s241 = sand.u32 %s42, 1
        %s242 = scalar_lea.sflag [#allocation4], %s241
        %s243 = sand.u32 %s42, 1
        %s244 = smul.addr %s243, 8
        %s245 = scalar_lea.vmem [#allocation3], %s244
        %p246 = pneg %p55
        %p247 = pneg %p52
        %p248 = scmp.lt.s32.totalorder %s27, 0
        %s249 = scalar_select %p248, %s27, 0
        %s250 = smul.addr %s249, 8
        %s251 = scalar_lea.vmem %s1, %s250
        %p252 = pneg %p81
        %p253 = pneg %p78
        %p254 = scmp.lt.s32.totalorder %s27, 0
        %s255 = scalar_select %p254, %s27, 0
        %s256 = smul.addr %s255, 8
        %s257 = scalar_lea.vmem %s2, %s256
        %p258 = pneg %p107
        %p259 = pneg %p104
        %p260 = pneg %p128
        %p261 = pneg %p125
        %p262 = pneg %p156
        %p263 = pneg %p153
        %s264 = sand.u32 %s143, 1
        %s265 = scalar_lea.sflag [#allocation5], %s264
        %s266 = sand.u32 %s143, 1
        %s267 = smul.addr %s266, 16
        %s268 = scalar_lea.vmem [#allocation8], %s267
        %p269 = scmp.lt.s32.totalorder %s27, 0
        %s270 = scalar_select %p269, %s27, 0
        %s271 = smul.addr %s270, 8
        %s272 = scalar_lea.vmem %s1, %s271
        %p273 = scmp.lt.s32.totalorder %s27, 0
        %s274 = scalar_select %p273, %s27, 0
        %s275 = smul.addr %s274, 8
        %s276 = scalar_lea.vmem %s2, %s275
        %v277 = vld [vmem:[%s232] sm:$0xff]
        %v279 = vcombine.high %v277, %v277
        %280 = vrot.lane.b32.xlu0 %v279, 17
        %v281 = vpop.permute.xlu0 %280
        %283 = vrot.lane.b32.xlu0 %v277, 17
        %v284 = vpop.permute.xlu0 %283
        %vm285 = vcmask 138240
        %v286 = vsel %vm285, %v284, %v281
        %v289 = vsel %vm285, %v281, %v284
        %v290 = vld [vmem:[#allocation6] ss:$8 sm:$0x3]
        %v292 = vlaneseq
        %v293 = vshrl.u32 %v292, 7
        %v294 = vsub.s32 0, %v293
        %v295 = vrot.slane %v290, %v294
        %v296 = vlaneseq
        %v297 = vshrl.u32 %v296, 7
        %v298 = vsub.s32 1, %v297
        %v299 = vrot.slane %v290, %v298
        %v302 = vmul.f32 %v289, %v295
        %v303 = vmul.f32 %v286, %v299
        %vm304 = vcmask 1043456
        %v305 = vsel %vm304, %v302, 0.0
        %v306 = vsel %vm304, %v303, 0.0
        %307 = vst [vmem:[#allocation2] sm:$0xff] %v305
        %308 = vst [vmem:[#allocation2 + $0x8] sm:$0xff] %v306
        %309 = vrot.lane.b32.xlu0 %v279, 16
        %v310 = vpop.permute.xlu0 %309
        %312 = vrot.lane.b32.xlu0 %v277, 16
        %v313 = vpop.permute.xlu0 %312
        %vm314 = vcmask 130048
        %v315 = vsel %vm314, %v313, %v310
        %v318 = vsel %vm314, %v310, %v313
        %s319 = scalar_lea.vmem [#allocation6], 1
        %v320 = vld [vmem:[%s319] ss:$8 sm:$0x3]
        %v322 = vlaneseq
        %v323 = vshrl.u32 %v322, 7
        %v324 = vsub.s32 0, %v323
        %v325 = vrot.slane %v320, %v324
        %v326 = vlaneseq
        %v327 = vshrl.u32 %v326, 7
        %v328 = vsub.s32 1, %v327
        %v329 = vrot.slane %v320, %v328
        %v332 = vmul.f32 %v318, %v325
        %v333 = vmul.f32 %v315, %v329
        %v334 = vsel %vm304, %v332, 0.0
        %v335 = vsel %vm304, %v333, 0.0
        %336 = vst [vmem:[#allocation2 + $0x10] sm:$0xff] %v334
        %337 = vst [vmem:[#allocation2 + $0x18] sm:$0xff] %v335
        %338 = vrot.lane.b32.xlu0 %v279, 15
        %v339 = vpop.permute.xlu0 %338
        %341 = vrot.lane.b32.xlu0 %v277, 15
        %v342 = vpop.permute.xlu0 %341
        %vm343 = vcmask 121856
        %v344 = vsel %vm343, %v342, %v339
        %v347 = vsel %vm343, %v339, %v342
        %s348 = scalar_lea.vmem [#allocation6], 2
        %v349 = vld [vmem:[%s348] ss:$8 sm:$0x3]
        %v351 = vlaneseq
        %v352 = vshrl.u32 %v351, 7
        %v353 = vsub.s32 0, %v352
        %v354 = vrot.slane %v349, %v353
        %v355 = vlaneseq
        %v356 = vshrl.u32 %v355, 7
        %v357 = vsub.s32 1, %v356
        %v358 = vrot.slane %v349, %v357
        %v361 = vmul.f32 %v347, %v354
        %v362 = vmul.f32 %v344, %v358
        %v363 = vsel %vm304, %v361, 0.0
        %v364 = vsel %vm304, %v362, 0.0
        %365 = vst [vmem:[#allocation2 + $0x20] sm:$0xff] %v363
        %366 = vst [vmem:[#allocation2 + $0x28] sm:$0xff] %v364
        %367 = vrot.lane.b32.xlu0 %v279, 1
        %v368 = vpop.permute.xlu0 %367
        %370 = vrot.lane.b32.xlu0 %v277, 1
        %v371 = vpop.permute.xlu0 %370
        %vm372 = vcmask 7168
        %v373 = vsel %vm372, %v371, %v368
        %v376 = vsel %vm372, %v368, %v371
        %s377 = scalar_lea.vmem [#allocation6], 3
        %v378 = vld [vmem:[%s377] ss:$8 sm:$0x3]
        %v380 = vlaneseq
        %v381 = vshrl.u32 %v380, 7
        %v382 = vsub.s32 0, %v381
        %v383 = vrot.slane %v378, %v382
        %v384 = vlaneseq
        %v385 = vshrl.u32 %v384, 7
        %v386 = vsub.s32 1, %v385
        %v387 = vrot.slane %v378, %v386
        %v390 = vmul.f32 %v376, %v383
        %v391 = vmul.f32 %v373, %v387
        %v392 = vsel %vm304, %v390, 0.0
        %v393 = vsel %vm304, %v391, 0.0
        %394 = vst [vmem:[#allocation2 + $0x30] sm:$0xff] %v392
        %395 = vst [vmem:[#allocation2 + $0x38] sm:$0xff] %v393
        %v397 = vsel %vm304, %v277, 0.0
        %v398 = vsel %vm304, %v279, 0.0
        %399 = vst [vmem:[#allocation2 + $0x40] sm:$0xff] %v397
        %400 = vst [vmem:[#allocation2 + $0x48] sm:$0xff] %v398
        %401 = vrot.lane.b32.xlu0 %v277, 127
        %v402 = vpop.permute.xlu0 %401
        %403 = vrot.lane.b32.xlu0 %v279, 127
        %v404 = vpop.permute.xlu0 %403
        %vm405 = vcmask 1039360
        %v406 = vsel %vm405, %v402, %v404
        %v410 = vsel %vm405, %v404, %v402
        %s411 = scalar_lea.vmem [#allocation6], 5
        %v412 = vld [vmem:[%s411] ss:$8 sm:$0x3]
        %v414 = vlaneseq
        %v415 = vshrl.u32 %v414, 7
        %v416 = vsub.s32 0, %v415
        %v417 = vrot.slane %v412, %v416
        %v418 = vlaneseq
        %v419 = vshrl.u32 %v418, 7
        %v420 = vsub.s32 1, %v419
        %v421 = vrot.slane %v412, %v420
        %v424 = vmul.f32 %v406, %v417
        %v425 = vmul.f32 %v410, %v421
        %v426 = vsel %vm304, %v424, 0.0
        %v427 = vsel %vm304, %v425, 0.0
        %428 = vst [vmem:[#allocation2 + $0x50] sm:$0xff] %v426
        %429 = vst [vmem:[#allocation2 + $0x58] sm:$0xff] %v427
        %430 = vrot.lane.b32.xlu0 %v277, 113
        %v431 = vpop.permute.xlu0 %430
        %432 = vrot.lane.b32.xlu0 %v279, 113
        %v433 = vpop.permute.xlu0 %432
        %vm434 = vcmask 924672
        %v435 = vsel %vm434, %v431, %v433
        %v439 = vsel %vm434, %v433, %v431
        %s440 = scalar_lea.vmem [#allocation6], 6
        %v441 = vld [vmem:[%s440] ss:$8 sm:$0x3]
        %v443 = vlaneseq
        %v444 = vshrl.u32 %v443, 7
        %v445 = vsub.s32 0, %v444
        %v446 = vrot.slane %v441, %v445
        %v447 = vlaneseq
        %v448 = vshrl.u32 %v447, 7
        %v449 = vsub.s32 1, %v448
        %v450 = vrot.slane %v441, %v449
        %v453 = vmul.f32 %v435, %v446
        %v454 = vmul.f32 %v439, %v450
        %v455 = vsel %vm304, %v453, 0.0
        %v456 = vsel %vm304, %v454, 0.0
        %457 = vst [vmem:[#allocation2 + $0x60] sm:$0xff] %v455
        %458 = vst [vmem:[#allocation2 + $0x68] sm:$0xff] %v456
        %459 = vrot.lane.b32.xlu0 %v277, 112
        %v460 = vpop.permute.xlu0 %459
        %461 = vrot.lane.b32.xlu0 %v279, 112
        %v462 = vpop.permute.xlu0 %461
        %vm463 = vcmask 916480
        %v464 = vsel %vm463, %v460, %v462
        %v468 = vsel %vm463, %v462, %v460
        %s469 = scalar_lea.vmem [#allocation6], 7
        %v470 = vld [vmem:[%s469] ss:$8 sm:$0x3]
        %v472 = vlaneseq
        %v473 = vshrl.u32 %v472, 7
        %v474 = vsub.s32 0, %v473
        %v475 = vrot.slane %v470, %v474
        %v476 = vlaneseq
        %v477 = vshrl.u32 %v476, 7
        %v478 = vsub.s32 1, %v477
        %v479 = vrot.slane %v470, %v478
        %v482 = vmul.f32 %v464, %v475
        %v483 = vmul.f32 %v468, %v479
        %v484 = vsel %vm304, %v482, 0.0
        %v485 = vsel %vm304, %v483, 0.0
        %486 = vst [vmem:[#allocation2 + $0x70] sm:$0xff] %v484
        %487 = vst [vmem:[#allocation2 + $0x78] sm:$0xff] %v485
        %488 = vrot.lane.b32.xlu0 %v277, 111
        %v489 = vpop.permute.xlu0 %488
        %490 = vrot.lane.b32.xlu0 %v279, 111
        %v491 = vpop.permute.xlu0 %490
        %vm492 = vcmask 908288
        %v493 = vsel %vm492, %v489, %v491
        %v497 = vsel %vm492, %v491, %v489
        %s498 = scalar_lea.vmem [#allocation6], 16
        %v499 = vld [vmem:[%s498] ss:$8 sm:$0x3]
        %v501 = vlaneseq
        %v502 = vshrl.u32 %v501, 7
        %v503 = vsub.s32 0, %v502
        %v504 = vrot.slane %v499, %v503
        %v505 = vlaneseq
        %v506 = vshrl.u32 %v505, 7
        %v507 = vsub.s32 1, %v506
        %v508 = vrot.slane %v499, %v507
        %v511 = vmul.f32 %v493, %v504
        %v512 = vmul.f32 %v497, %v508
        %v513 = vsel %vm304, %v511, 0.0
        %v514 = vsel %vm304, %v512, 0.0
        %515 = vst [vmem:[#allocation2 + $0x80] sm:$0xff] %v513
        %516 = vst [vmem:[#allocation2 + $0x88] sm:$0xff] %v514
        %v517 = vld [vmem:[%s272] sm:$0xff]
        %v518 = vld [vmem:[#allocation2] sm:$0xff]
        %v519 = vld [vmem:[#allocation2 + $0x8] sm:$0xff]
        %v520 = vld [vmem:[#allocation2 + $0x10] sm:$0xff]
        %v521 = vld [vmem:[#allocation2 + $0x18] sm:$0xff]
        %v522 = vld [vmem:[#allocation2 + $0x20] sm:$0xff]
        %v523 = vld [vmem:[#allocation2 + $0x28] sm:$0xff]
        %v524 = vld [vmem:[#allocation2 + $0x30] sm:$0xff]
        %v525 = vld [vmem:[#allocation2 + $0x38] sm:$0xff]
        %v526 = vld [vmem:[#allocation2 + $0x40] sm:$0xff]
        %v527 = vld [vmem:[#allocation2 + $0x48] sm:$0xff]
        %v528 = vld [vmem:[#allocation2 + $0x50] sm:$0xff]
        %v529 = vld [vmem:[#allocation2 + $0x58] sm:$0xff]
        %v530 = vld [vmem:[#allocation2 + $0x60] sm:$0xff]
        %v531 = vld [vmem:[#allocation2 + $0x68] sm:$0xff]
        %v532 = vld [vmem:[#allocation2 + $0x70] sm:$0xff]
        %v533 = vld [vmem:[#allocation2 + $0x78] sm:$0xff]
        %v534 = vld [vmem:[#allocation2 + $0x80] sm:$0xff]
        %v535 = vld [vmem:[#allocation2 + $0x88] sm:$0xff]
        %v536 = vld [vmem:[%s276] sm:$0xff]
        %538 = vset.pattern.permute.xlu0 0
        %539 = vperm.xlu0 %538, %v536
        %v540 = vpop.permute.xlu0 %539
        %vm542 = vcmask 588800
        %v544 = vsel %vm542, %v517, 0
        %546 = vmatprep.subr.mxu0 0.0
        %547 = vmatpush1.msra.mxu0 0.0
        %548 = vmatprep.subr.mxu0 0.0
        %549 = vmatpush1.msra.mxu0 0.0
        %550 = vmatprep.subr.mxu0 0.0
        %551 = vmatpush1.msra.mxu0 0.0
        %552 = vmatprep.subr.mxu0 0.0
        %553 = vmatpush1.msra.mxu0 0.0
        %554 = vmatprep.subr.mxu0 0.0
        %555 = vmatpush1.msra.mxu0 0.0
        %556 = vmatprep.subr.mxu0 0.0
        %557 = vmatpush1.msra.mxu0 0.0
        %558 = vmatprep.subr.mxu0 0.0
        %559 = vmatpush1.msra.mxu0 0.0
        %v560 = vand.u32 %v535, 4294901760
        %561 = vmatprep.subr.mxu0 %v560
        %v562 = vand.u32 %v534, 4294901760
        %563 = vmatpush1.msra.mxu0 %v562
        %v564 = vand.u32 %v533, 4294901760
        %565 = vmatprep.subr.mxu0 %v564
        %v566 = vand.u32 %v532, 4294901760
        %567 = vmatpush1.msra.mxu0 %v566
        %v568 = vand.u32 %v531, 4294901760
        %569 = vmatprep.subr.mxu0 %v568
        %v570 = vand.u32 %v530, 4294901760
        %571 = vmatpush1.msra.mxu0 %v570
        %v572 = vand.u32 %v529, 4294901760
        %573 = vmatprep.subr.mxu0 %v572
        %v574 = vand.u32 %v528, 4294901760
        %575 = vmatpush1.msra.mxu0 %v574
        %v576 = vand.u32 %v527, 4294901760
        %577 = vmatprep.subr.mxu0 %v576
        %v578 = vand.u32 %v526, 4294901760
        %579 = vmatpush1.msra.mxu0 %v578
        %v580 = vand.u32 %v525, 4294901760
        %581 = vmatprep.subr.mxu0 %v580
        %v582 = vand.u32 %v524, 4294901760
        %583 = vmatpush1.msra.mxu0 %v582
        %v584 = vand.u32 %v523, 4294901760
        %585 = vmatprep.subr.mxu0 %v584
        %v586 = vand.u32 %v522, 4294901760
        %587 = vmatpush1.msra.mxu0 %v586
        %v588 = vand.u32 %v521, 4294901760
        %589 = vmatprep.subr.mxu0 %v588
        %v590 = vand.u32 %v520, 4294901760
        %591 = vmatpush1.msra.mxu0 %v590
        %v592 = vand.u32 %v519, 4294901760
        %593 = vmatprep.subr.mxu0 %v592
        %v594 = vand.u32 %v518, 4294901760
        %595 = vmatpush1.msra.mxu0 %v594
        %596 = vmatprep.subr.mxu0 0.0
        %597 = vmatpush2.msra.mxu0 0.0
        %598 = vmatprep.subr.mxu0 0.0
        %599 = vmatpush2.msra.mxu0 0.0
        %600 = vmatprep.subr.mxu0 0.0
        %601 = vmatpush2.msra.mxu0 0.0
        %602 = vmatprep.subr.mxu0 0.0
        %603 = vmatpush2.msra.mxu0 0.0
        %604 = vmatprep.subr.mxu0 0.0
        %605 = vmatpush2.msra.mxu0 0.0
        %606 = vmatprep.subr.mxu0 0.0
        %607 = vmatpush2.msra.mxu0 0.0
        %608 = vmatprep.subr.mxu0 0.0
        %609 = vmatpush2.msra.mxu0 0.0
        %610 = vmatprep.subr.mxu0 0.0
        %611 = vmatpush2.msra.mxu0 0.0
        %612 = vmatprep.subr.mxu0 0.0
        %613 = vmatpush2.msra.mxu0 0.0
        %614 = vmatprep.subr.mxu0 0.0
        %615 = vmatpush2.msra.mxu0 0.0
        %616 = vmatprep.subr.mxu0 0.0
        %617 = vmatpush2.msra.mxu0 0.0
        %618 = vmatprep.subr.mxu0 0.0
        %619 = vmatpush2.msra.mxu0 0.0
        %620 = vmatprep.subr.mxu0 0.0
        %621 = vmatpush2.msra.mxu0 0.0
        %622 = vmatprep.subr.mxu0 0.0
        %623 = vmatpush2.msra.mxu0 0.0
        %624 = vmatprep.subr.mxu0 0.0
        %625 = vmatpush2.msra.mxu0 0.0
        %626 = vmatprep.subr.mxu0 0.0
        %627 = vmatpush2.msra.mxu0 0.0
        %628 = vmatprep.mubr.f32.mxu0 0.0
        %v629 = vand.u32 %v544, 4294901760
        %v630 = vsub.f32 %v544, %v629
        %v631 = vand.u32 %v630, 4294901760
        %v632 = vsub.f32 %v630, %v631
        %v633 = vand.u32 %v632, 4294901760
        %634 = vmatmul.mubr.f32.gmra.mxu0 %v633
        %v635 = vpop.f32.mrf.mxu0
        %v636 = vadd.f32 %v540, %v635
        %v637 = vpop.f32.mrf.mxu0
        %v638 = vadd.f32 %v540, %v637
        %639 = vdwg.mxu0
        %640 = vmatprep.subr.mxu0 0.0
        %641 = vmatpush1.msra.mxu0 0.0
        %642 = vmatprep.subr.mxu0 0.0
        %643 = vmatpush1.msra.mxu0 0.0
        %644 = vmatprep.subr.mxu0 0.0
        %645 = vmatpush1.msra.mxu0 0.0
        %646 = vmatprep.subr.mxu0 0.0
        %647 = vmatpush1.msra.mxu0 0.0
        %648 = vmatprep.subr.mxu0 0.0
        %649 = vmatpush1.msra.mxu0 0.0
        %650 = vmatprep.subr.mxu0 0.0
        %651 = vmatpush1.msra.mxu0 0.0
        %652 = vmatprep.subr.mxu0 0.0
        %653 = vmatpush1.msra.mxu0 0.0
        %v654 = vand.u32 %v535, 4294901760
        %v655 = vsub.f32 %v535, %v654
        %v656 = vand.u32 %v655, 4294901760
        %v657 = vsub.f32 %v655, %v656
        %v658 = vand.u32 %v657, 4294901760
        %659 = vmatprep.subr.mxu0 %v658
        %v660 = vand.u32 %v534, 4294901760
        %v661 = vsub.f32 %v534, %v660
        %v662 = vand.u32 %v661, 4294901760
        %v663 = vsub.f32 %v661, %v662
        %v664 = vand.u32 %v663, 4294901760
        %665 = vmatpush1.msra.mxu0 %v664
        %v666 = vand.u32 %v533, 4294901760
        %v667 = vsub.f32 %v533, %v666
        %v668 = vand.u32 %v667, 4294901760
        %v669 = vsub.f32 %v667, %v668
        %v670 = vand.u32 %v669, 4294901760
        %671 = vmatprep.subr.mxu0 %v670
        %v672 = vand.u32 %v532, 4294901760
        %v673 = vsub.f32 %v532, %v672
        %v674 = vand.u32 %v673, 4294901760
        %v675 = vsub.f32 %v673, %v674
        %v676 = vand.u32 %v675, 4294901760
        %677 = vmatpush1.msra.mxu0 %v676
        %v678 = vand.u32 %v531, 4294901760
        %v679 = vsub.f32 %v531, %v678
        %v680 = vand.u32 %v679, 4294901760
        %v681 = vsub.f32 %v679, %v680
        %v682 = vand.u32 %v681, 4294901760
        %683 = vmatprep.subr.mxu0 %v682
        %v684 = vand.u32 %v530, 4294901760
        %v685 = vsub.f32 %v530, %v684
        %v686 = vand.u32 %v685, 4294901760
        %v687 = vsub.f32 %v685, %v686
        %v688 = vand.u32 %v687, 4294901760
        %689 = vmatpush1.msra.mxu0 %v688
        %v690 = vand.u32 %v529, 4294901760
        %v691 = vsub.f32 %v529, %v690
        %v692 = vand.u32 %v691, 4294901760
        %v693 = vsub.f32 %v691, %v692
        %v694 = vand.u32 %v693, 4294901760
        %695 = vmatprep.subr.mxu0 %v694
        %v696 = vand.u32 %v528, 4294901760
        %v697 = vsub.f32 %v528, %v696
        %v698 = vand.u32 %v697, 4294901760
        %v699 = vsub.f32 %v697, %v698
        %v700 = vand.u32 %v699, 4294901760
        %701 = vmatpush1.msra.mxu0 %v700
        %v702 = vand.u32 %v527, 4294901760
        %v703 = vsub.f32 %v527, %v702
        %v704 = vand.u32 %v703, 4294901760
        %v705 = vsub.f32 %v703, %v704
        %v706 = vand.u32 %v705, 4294901760
        %707 = vmatprep.subr.mxu0 %v706
        %v708 = vand.u32 %v526, 4294901760
        %v709 = vsub.f32 %v526, %v708
        %v710 = vand.u32 %v709, 4294901760
        %v711 = vsub.f32 %v709, %v710
        %v712 = vand.u32 %v711, 4294901760
        %713 = vmatpush1.msra.mxu0 %v712
        %v714 = vand.u32 %v525, 4294901760
        %v715 = vsub.f32 %v525, %v714
        %v716 = vand.u32 %v715, 4294901760
        %v717 = vsub.f32 %v715, %v716
        %v718 = vand.u32 %v717, 4294901760
        %719 = vmatprep.subr.mxu0 %v718
        %v720 = vand.u32 %v524, 4294901760
        %v721 = vsub.f32 %v524, %v720
        %v722 = vand.u32 %v721, 4294901760
        %v723 = vsub.f32 %v721, %v722
        %v724 = vand.u32 %v723, 4294901760
        %725 = vmatpush1.msra.mxu0 %v724
        %v726 = vand.u32 %v523, 4294901760
        %v727 = vsub.f32 %v523, %v726
        %v728 = vand.u32 %v727, 4294901760
        %v729 = vsub.f32 %v727, %v728
        %v730 = vand.u32 %v729, 4294901760
        %731 = vmatprep.subr.mxu0 %v730
        %v732 = vand.u32 %v522, 4294901760
        %v733 = vsub.f32 %v522, %v732
        %v734 = vand.u32 %v733, 4294901760
        %v735 = vsub.f32 %v733, %v734
        %v736 = vand.u32 %v735, 4294901760
        %737 = vmatpush1.msra.mxu0 %v736
        %v738 = vand.u32 %v521, 4294901760
        %v739 = vsub.f32 %v521, %v738
        %v740 = vand.u32 %v739, 4294901760
        %v741 = vsub.f32 %v739, %v740
        %v742 = vand.u32 %v741, 4294901760
        %743 = vmatprep.subr.mxu0 %v742
        %v744 = vand.u32 %v520, 4294901760
        %v745 = vsub.f32 %v520, %v744
        %v746 = vand.u32 %v745, 4294901760
        %v747 = vsub.f32 %v745, %v746
        %v748 = vand.u32 %v747, 4294901760
        %749 = vmatpush1.msra.mxu0 %v748
        %v750 = vand.u32 %v519, 4294901760
        %v751 = vsub.f32 %v519, %v750
        %v752 = vand.u32 %v751, 4294901760
        %v753 = vsub.f32 %v751, %v752
        %v754 = vand.u32 %v753, 4294901760
        %755 = vmatprep.subr.mxu0 %v754
        %v756 = vand.u32 %v518, 4294901760
        %v757 = vsub.f32 %v518, %v756
        %v758 = vand.u32 %v757, 4294901760
        %v759 = vsub.f32 %v757, %v758
        %v760 = vand.u32 %v759, 4294901760
        %761 = vmatpush1.msra.mxu0 %v760
        %762 = vmatprep.subr.mxu0 0.0
        %763 = vmatpush2.msra.mxu0 0.0
        %764 = vmatprep.subr.mxu0 0.0
        %765 = vmatpush2.msra.mxu0 0.0
        %766 = vmatprep.subr.mxu0 0.0
        %767 = vmatpush2.msra.mxu0 0.0
        %768 = vmatprep.subr.mxu0 0.0
        %769 = vmatpush2.msra.mxu0 0.0
        %770 = vmatprep.subr.mxu0 0.0
        %771 = vmatpush2.msra.mxu0 0.0
        %772 = vmatprep.subr.mxu0 0.0
        %773 = vmatpush2.msra.mxu0 0.0
        %774 = vmatprep.subr.mxu0 0.0
        %775 = vmatpush2.msra.mxu0 0.0
        %776 = vmatprep.subr.mxu0 0.0
        %777 = vmatpush2.msra.mxu0 0.0
        %778 = vmatprep.subr.mxu0 0.0
        %779 = vmatpush2.msra.mxu0 0.0
        %780 = vmatprep.subr.mxu0 0.0
        %781 = vmatpush2.msra.mxu0 0.0
        %782 = vmatprep.subr.mxu0 0.0
        %783 = vmatpush2.msra.mxu0 0.0
        %784 = vmatprep.subr.mxu0 0.0
        %785 = vmatpush2.msra.mxu0 0.0
        %786 = vmatprep.subr.mxu0 0.0
        %787 = vmatpush2.msra.mxu0 0.0
        %788 = vmatprep.subr.mxu0 0.0
        %789 = vmatpush2.msra.mxu0 0.0
        %790 = vmatprep.subr.mxu0 0.0
        %791 = vmatpush2.msra.mxu0 0.0
        %792 = vmatprep.subr.mxu0 0.0
        %793 = vmatpush2.msra.mxu0 0.0
        %794 = vmatprep.mubr.f32.mxu0 0.0
        %v795 = vand.u32 %v544, 4294901760
        %796 = vmatmul.mubr.f32.gmra.mxu0 %v795
        %v797 = vpop.f32.mrf.mxu0
        %v798 = vadd.f32 %v636, %v797
        %v799 = vpop.f32.mrf.mxu0
        %v800 = vadd.f32 %v638, %v799
        %801 = vdwg.mxu0
        %802 = vmatprep.subr.mxu0 0.0
        %803 = vmatpush1.msra.mxu0 0.0
        %804 = vmatprep.subr.mxu0 0.0
        %805 = vmatpush1.msra.mxu0 0.0
        %806 = vmatprep.subr.mxu0 0.0
        %807 = vmatpush1.msra.mxu0 0.0
        %808 = vmatprep.subr.mxu0 0.0
        %809 = vmatpush1.msra.mxu0 0.0
        %810 = vmatprep.subr.mxu0 0.0
        %811 = vmatpush1.msra.mxu0 0.0
        %812 = vmatprep.subr.mxu0 0.0
        %813 = vmatpush1.msra.mxu0 0.0
        %814 = vmatprep.subr.mxu0 0.0
        %815 = vmatpush1.msra.mxu0 0.0
        %v816 = vand.u32 %v535, 4294901760
        %v817 = vsub.f32 %v535, %v816
        %818 = vmatprep.subr.mxu0 %v817
        %v819 = vand.u32 %v534, 4294901760
        %v820 = vsub.f32 %v534, %v819
        %821 = vmatpush1.msra.mxu0 %v820
        %v822 = vand.u32 %v533, 4294901760
        %v823 = vsub.f32 %v533, %v822
        %824 = vmatprep.subr.mxu0 %v823
        %v825 = vand.u32 %v532, 4294901760
        %v826 = vsub.f32 %v532, %v825
        %827 = vmatpush1.msra.mxu0 %v826
        %v828 = vand.u32 %v531, 4294901760
        %v829 = vsub.f32 %v531, %v828
        %830 = vmatprep.subr.mxu0 %v829
        %v831 = vand.u32 %v530, 4294901760
        %v832 = vsub.f32 %v530, %v831
        %833 = vmatpush1.msra.mxu0 %v832
        %v834 = vand.u32 %v529, 4294901760
        %v835 = vsub.f32 %v529, %v834
        %836 = vmatprep.subr.mxu0 %v835
        %v837 = vand.u32 %v528, 4294901760
        %v838 = vsub.f32 %v528, %v837
        %839 = vmatpush1.msra.mxu0 %v838
        %v840 = vand.u32 %v527, 4294901760
        %v841 = vsub.f32 %v527, %v840
        %842 = vmatprep.subr.mxu0 %v841
        %v843 = vand.u32 %v526, 4294901760
        %v844 = vsub.f32 %v526, %v843
        %845 = vmatpush1.msra.mxu0 %v844
        %v846 = vand.u32 %v525, 4294901760
        %v847 = vsub.f32 %v525, %v846
        %848 = vmatprep.subr.mxu0 %v847
        %v849 = vand.u32 %v524, 4294901760
        %v850 = vsub.f32 %v524, %v849
        %851 = vmatpush1.msra.mxu0 %v850
        %v852 = vand.u32 %v523, 4294901760
        %v853 = vsub.f32 %v523, %v852
        %854 = vmatprep.subr.mxu0 %v853
        %v855 = vand.u32 %v522, 4294901760
        %v856 = vsub.f32 %v522, %v855
        %857 = vmatpush1.msra.mxu0 %v856
        %v858 = vand.u32 %v521, 4294901760
        %v859 = vsub.f32 %v521, %v858
        %860 = vmatprep.subr.mxu0 %v859
        %v861 = vand.u32 %v520, 4294901760
        %v862 = vsub.f32 %v520, %v861
        %863 = vmatpush1.msra.mxu0 %v862
        %v864 = vand.u32 %v519, 4294901760
        %v865 = vsub.f32 %v519, %v864
        %866 = vmatprep.subr.mxu0 %v865
        %v867 = vand.u32 %v518, 4294901760
        %v868 = vsub.f32 %v518, %v867
        %869 = vmatpush1.msra.mxu0 %v868
        %870 = vmatprep.subr.mxu0 0.0
        %871 = vmatpush2.msra.mxu0 0.0
        %872 = vmatprep.subr.mxu0 0.0
        %873 = vmatpush2.msra.mxu0 0.0
        %874 = vmatprep.subr.mxu0 0.0
        %875 = vmatpush2.msra.mxu0 0.0
        %876 = vmatprep.subr.mxu0 0.0
        %877 = vmatpush2.msra.mxu0 0.0
        %878 = vmatprep.subr.mxu0 0.0
        %879 = vmatpush2.msra.mxu0 0.0
        %880 = vmatprep.subr.mxu0 0.0
        %881 = vmatpush2.msra.mxu0 0.0
        %882 = vmatprep.subr.mxu0 0.0
        %883 = vmatpush2.msra.mxu0 0.0
        %884 = vmatprep.subr.mxu0 0.0
        %885 = vmatpush2.msra.mxu0 0.0
        %886 = vmatprep.subr.mxu0 0.0
        %887 = vmatpush2.msra.mxu0 0.0
        %888 = vmatprep.subr.mxu0 0.0
        %889 = vmatpush2.msra.mxu0 0.0
        %890 = vmatprep.subr.mxu0 0.0
        %891 = vmatpush2.msra.mxu0 0.0
        %892 = vmatprep.subr.mxu0 0.0
        %893 = vmatpush2.msra.mxu0 0.0
        %894 = vmatprep.subr.mxu0 0.0
        %895 = vmatpush2.msra.mxu0 0.0
        %896 = vmatprep.subr.mxu0 0.0
        %897 = vmatpush2.msra.mxu0 0.0
        %898 = vmatprep.subr.mxu0 0.0
        %899 = vmatpush2.msra.mxu0 0.0
        %900 = vmatprep.subr.mxu0 0.0
        %901 = vmatpush2.msra.mxu0 0.0
        %902 = vmatprep.mubr.f32.mxu0 0.0
        %v903 = vand.u32 %v544, 4294901760
        %v904 = vsub.f32 %v544, %v903
        %905 = vmatmul.mubr.f32.gmra.mxu0 %v904
        %v906 = vpop.f32.mrf.mxu0
        %v907 = vadd.f32 %v798, %v906
        %v908 = vpop.f32.mrf.mxu0
        %v909 = vadd.f32 %v800, %v908
        %910 = vdwg.mxu0
        %911 = vmatprep.subr.mxu0 0.0
        %912 = vmatpush1.msra.mxu0 0.0
        %913 = vmatprep.subr.mxu0 0.0
        %914 = vmatpush1.msra.mxu0 0.0
        %915 = vmatprep.subr.mxu0 0.0
        %916 = vmatpush1.msra.mxu0 0.0
        %917 = vmatprep.subr.mxu0 0.0
        %918 = vmatpush1.msra.mxu0 0.0
        %919 = vmatprep.subr.mxu0 0.0
        %920 = vmatpush1.msra.mxu0 0.0
        %921 = vmatprep.subr.mxu0 0.0
        %922 = vmatpush1.msra.mxu0 0.0
        %923 = vmatprep.subr.mxu0 0.0
        %924 = vmatpush1.msra.mxu0 0.0
        %v925 = vand.u32 %v535, 4294901760
        %926 = vmatprep.subr.mxu0 %v925
        %v927 = vand.u32 %v534, 4294901760
        %928 = vmatpush1.msra.mxu0 %v927
        %v929 = vand.u32 %v533, 4294901760
        %930 = vmatprep.subr.mxu0 %v929
        %v931 = vand.u32 %v532, 4294901760
        %932 = vmatpush1.msra.mxu0 %v931
        %v933 = vand.u32 %v531, 4294901760
        %934 = vmatprep.subr.mxu0 %v933
        %v935 = vand.u32 %v530, 4294901760
        %936 = vmatpush1.msra.mxu0 %v935
        %v937 = vand.u32 %v529, 4294901760
        %938 = vmatprep.subr.mxu0 %v937
        %v939 = vand.u32 %v528, 4294901760
        %940 = vmatpush1.msra.mxu0 %v939
        %v941 = vand.u32 %v527, 4294901760
        %942 = vmatprep.subr.mxu0 %v941
        %v943 = vand.u32 %v526, 4294901760
        %944 = vmatpush1.msra.mxu0 %v943
        %v945 = vand.u32 %v525, 4294901760
        %946 = vmatprep.subr.mxu0 %v945
        %v947 = vand.u32 %v524, 4294901760
        %948 = vmatpush1.msra.mxu0 %v947
        %v949 = vand.u32 %v523, 4294901760
        %950 = vmatprep.subr.mxu0 %v949
        %v951 = vand.u32 %v522, 4294901760
        %952 = vmatpush1.msra.mxu0 %v951
        %v953 = vand.u32 %v521, 4294901760
        %954 = vmatprep.subr.mxu0 %v953
        %v955 = vand.u32 %v520, 4294901760
        %956 = vmatpush1.msra.mxu0 %v955
        %v957 = vand.u32 %v519, 4294901760
        %958 = vmatprep.subr.mxu0 %v957
        %v959 = vand.u32 %v518, 4294901760
        %960 = vmatpush1.msra.mxu0 %v959
        %961 = vmatprep.subr.mxu0 0.0
        %962 = vmatpush2.msra.mxu0 0.0
        %963 = vmatprep.subr.mxu0 0.0
        %964 = vmatpush2.msra.mxu0 0.0
        %965 = vmatprep.subr.mxu0 0.0
        %966 = vmatpush2.msra.mxu0 0.0
        %967 = vmatprep.subr.mxu0 0.0
        %968 = vmatpush2.msra.mxu0 0.0
        %969 = vmatprep.subr.mxu0 0.0
        %970 = vmatpush2.msra.mxu0 0.0
        %971 = vmatprep.subr.mxu0 0.0
        %972 = vmatpush2.msra.mxu0 0.0
        %973 = vmatprep.subr.mxu0 0.0
        %974 = vmatpush2.msra.mxu0 0.0
        %975 = vmatprep.subr.mxu0 0.0
        %976 = vmatpush2.msra.mxu0 0.0
        %977 = vmatprep.subr.mxu0 0.0
        %978 = vmatpush2.msra.mxu0 0.0
        %979 = vmatprep.subr.mxu0 0.0
        %980 = vmatpush2.msra.mxu0 0.0
        %981 = vmatprep.subr.mxu0 0.0
        %982 = vmatpush2.msra.mxu0 0.0
        %983 = vmatprep.subr.mxu0 0.0
        %984 = vmatpush2.msra.mxu0 0.0
        %985 = vmatprep.subr.mxu0 0.0
        %986 = vmatpush2.msra.mxu0 0.0
        %987 = vmatprep.subr.mxu0 0.0
        %988 = vmatpush2.msra.mxu0 0.0
        %989 = vmatprep.subr.mxu0 0.0
        %990 = vmatpush2.msra.mxu0 0.0
        %991 = vmatprep.subr.mxu0 0.0
        %992 = vmatpush2.msra.mxu0 0.0
        %993 = vmatprep.mubr.f32.mxu0 0.0
        %v994 = vand.u32 %v544, 4294901760
        %v995 = vsub.f32 %v544, %v994
        %v996 = vand.u32 %v995, 4294901760
        %997 = vmatmul.mubr.f32.gmra.mxu0 %v996
        %v998 = vpop.f32.mrf.mxu0
        %v999 = vadd.f32 %v907, %v998
        %v1000 = vpop.f32.mrf.mxu0
        %v1001 = vadd.f32 %v909, %v1000
        %1002 = vdwg.mxu0
        %1003 = vmatprep.subr.mxu0 0.0
        %1004 = vmatpush1.msra.mxu0 0.0
        %1005 = vmatprep.subr.mxu0 0.0
        %1006 = vmatpush1.msra.mxu0 0.0
        %1007 = vmatprep.subr.mxu0 0.0
        %1008 = vmatpush1.msra.mxu0 0.0
        %1009 = vmatprep.subr.mxu0 0.0
        %1010 = vmatpush1.msra.mxu0 0.0
        %1011 = vmatprep.subr.mxu0 0.0
        %1012 = vmatpush1.msra.mxu0 0.0
        %1013 = vmatprep.subr.mxu0 0.0
        %1014 = vmatpush1.msra.mxu0 0.0
        %1015 = vmatprep.subr.mxu0 0.0
        %1016 = vmatpush1.msra.mxu0 0.0
        %v1017 = vand.u32 %v535, 4294901760
        %v1018 = vsub.f32 %v535, %v1017
        %v1019 = vand.u32 %v1018, 4294901760
        %1020 = vmatprep.subr.mxu0 %v1019
        %v1021 = vand.u32 %v534, 4294901760
        %v1022 = vsub.f32 %v534, %v1021
        %v1023 = vand.u32 %v1022, 4294901760
        %1024 = vmatpush1.msra.mxu0 %v1023
        %v1025 = vand.u32 %v533, 4294901760
        %v1026 = vsub.f32 %v533, %v1025
        %v1027 = vand.u32 %v1026, 4294901760
        %1028 = vmatprep.subr.mxu0 %v1027
        %v1029 = vand.u32 %v532, 4294901760
        %v1030 = vsub.f32 %v532, %v1029
        %v1031 = vand.u32 %v1030, 4294901760
        %1032 = vmatpush1.msra.mxu0 %v1031
        %v1033 = vand.u32 %v531, 4294901760
        %v1034 = vsub.f32 %v531, %v1033
        %v1035 = vand.u32 %v1034, 4294901760
        %1036 = vmatprep.subr.mxu0 %v1035
        %v1037 = vand.u32 %v530, 4294901760
        %v1038 = vsub.f32 %v530, %v1037
        %v1039 = vand.u32 %v1038, 4294901760
        %1040 = vmatpush1.msra.mxu0 %v1039
        %v1041 = vand.u32 %v529, 4294901760
        %v1042 = vsub.f32 %v529, %v1041
        %v1043 = vand.u32 %v1042, 4294901760
        %1044 = vmatprep.subr.mxu0 %v1043
        %v1045 = vand.u32 %v528, 4294901760
        %v1046 = vsub.f32 %v528, %v1045
        %v1047 = vand.u32 %v1046, 4294901760
        %1048 = vmatpush1.msra.mxu0 %v1047
        %v1049 = vand.u32 %v527, 4294901760
        %v1050 = vsub.f32 %v527, %v1049
        %v1051 = vand.u32 %v1050, 4294901760
        %1052 = vmatprep.subr.mxu0 %v1051
        %v1053 = vand.u32 %v526, 4294901760
        %v1054 = vsub.f32 %v526, %v1053
        %v1055 = vand.u32 %v1054, 4294901760
        %1056 = vmatpush1.msra.mxu0 %v1055
        %v1057 = vand.u32 %v525, 4294901760
        %v1058 = vsub.f32 %v525, %v1057
        %v1059 = vand.u32 %v1058, 4294901760
        %1060 = vmatprep.subr.mxu0 %v1059
        %v1061 = vand.u32 %v524, 4294901760
        %v1062 = vsub.f32 %v524, %v1061
        %v1063 = vand.u32 %v1062, 4294901760
        %1064 = vmatpush1.msra.mxu0 %v1063
        %v1065 = vand.u32 %v523, 4294901760
        %v1066 = vsub.f32 %v523, %v1065
        %v1067 = vand.u32 %v1066, 4294901760
        %1068 = vmatprep.subr.mxu0 %v1067
        %v1069 = vand.u32 %v522, 4294901760
        %v1070 = vsub.f32 %v522, %v1069
        %v1071 = vand.u32 %v1070, 4294901760
        %1072 = vmatpush1.msra.mxu0 %v1071
        %v1073 = vand.u32 %v521, 4294901760
        %v1074 = vsub.f32 %v521, %v1073
        %v1075 = vand.u32 %v1074, 4294901760
        %1076 = vmatprep.subr.mxu0 %v1075
        %v1077 = vand.u32 %v520, 4294901760
        %v1078 = vsub.f32 %v520, %v1077
        %v1079 = vand.u32 %v1078, 4294901760
        %1080 = vmatpush1.msra.mxu0 %v1079
        %v1081 = vand.u32 %v519, 4294901760
        %v1082 = vsub.f32 %v519, %v1081
        %v1083 = vand.u32 %v1082, 4294901760
        %1084 = vmatprep.subr.mxu0 %v1083
        %v1085 = vand.u32 %v518, 4294901760
        %v1086 = vsub.f32 %v518, %v1085
        %v1087 = vand.u32 %v1086, 4294901760
        %1088 = vmatpush1.msra.mxu0 %v1087
        %1089 = vmatprep.subr.mxu0 0.0
        %1090 = vmatpush2.msra.mxu0 0.0
        %1091 = vmatprep.subr.mxu0 0.0
        %1092 = vmatpush2.msra.mxu0 0.0
        %1093 = vmatprep.subr.mxu0 0.0
        %1094 = vmatpush2.msra.mxu0 0.0
        %1095 = vmatprep.subr.mxu0 0.0
        %1096 = vmatpush2.msra.mxu0 0.0
        %1097 = vmatprep.subr.mxu0 0.0
        %1098 = vmatpush2.msra.mxu0 0.0
        %1099 = vmatprep.subr.mxu0 0.0
        %1100 = vmatpush2.msra.mxu0 0.0
        %1101 = vmatprep.subr.mxu0 0.0
        %1102 = vmatpush2.msra.mxu0 0.0
        %1103 = vmatprep.subr.mxu0 0.0
        %1104 = vmatpush2.msra.mxu0 0.0
        %1105 = vmatprep.subr.mxu0 0.0
        %1106 = vmatpush2.msra.mxu0 0.0
        %1107 = vmatprep.subr.mxu0 0.0
        %1108 = vmatpush2.msra.mxu0 0.0
        %1109 = vmatprep.subr.mxu0 0.0
        %1110 = vmatpush2.msra.mxu0 0.0
        %1111 = vmatprep.subr.mxu0 0.0
        %1112 = vmatpush2.msra.mxu0 0.0
        %1113 = vmatprep.subr.mxu0 0.0
        %1114 = vmatpush2.msra.mxu0 0.0
        %1115 = vmatprep.subr.mxu0 0.0
        %1116 = vmatpush2.msra.mxu0 0.0
        %1117 = vmatprep.subr.mxu0 0.0
        %1118 = vmatpush2.msra.mxu0 0.0
        %1119 = vmatprep.subr.mxu0 0.0
        %1120 = vmatpush2.msra.mxu0 0.0
        %1121 = vmatprep.mubr.f32.mxu0 0.0
        %v1122 = vand.u32 %v544, 4294901760
        %1123 = vmatmul.mubr.f32.gmra.mxu0 %v1122
        %v1124 = vpop.f32.mrf.mxu0
        %v1125 = vadd.f32 %v999, %v1124
        %v1126 = vpop.f32.mrf.mxu0
        %v1127 = vadd.f32 %v1001, %v1126
        %1128 = vdwg.mxu0
        %1129 = vmatprep.subr.mxu0 0.0
        %1130 = vmatpush1.msra.mxu0 0.0
        %1131 = vmatprep.subr.mxu0 0.0
        %1132 = vmatpush1.msra.mxu0 0.0
        %1133 = vmatprep.subr.mxu0 0.0
        %1134 = vmatpush1.msra.mxu0 0.0
        %1135 = vmatprep.subr.mxu0 0.0
        %1136 = vmatpush1.msra.mxu0 0.0
        %1137 = vmatprep.subr.mxu0 0.0
        %1138 = vmatpush1.msra.mxu0 0.0
        %1139 = vmatprep.subr.mxu0 0.0
        %1140 = vmatpush1.msra.mxu0 0.0
        %1141 = vmatprep.subr.mxu0 0.0
        %1142 = vmatpush1.msra.mxu0 0.0
        %v1143 = vand.u32 %v535, 4294901760
        %1144 = vmatprep.subr.mxu0 %v1143
        %v1145 = vand.u32 %v534, 4294901760
        %1146 = vmatpush1.msra.mxu0 %v1145
        %v1147 = vand.u32 %v533, 4294901760
        %1148 = vmatprep.subr.mxu0 %v1147
        %v1149 = vand.u32 %v532, 4294901760
        %1150 = vmatpush1.msra.mxu0 %v1149
        %v1151 = vand.u32 %v531, 4294901760
        %1152 = vmatprep.subr.mxu0 %v1151
        %v1153 = vand.u32 %v530, 4294901760
        %1154 = vmatpush1.msra.mxu0 %v1153
        %v1155 = vand.u32 %v529, 4294901760
        %1156 = vmatprep.subr.mxu0 %v1155
        %v1157 = vand.u32 %v528, 4294901760
        %1158 = vmatpush1.msra.mxu0 %v1157
        %v1159 = vand.u32 %v527, 4294901760
        %1160 = vmatprep.subr.mxu0 %v1159
        %v1161 = vand.u32 %v526, 4294901760
        %1162 = vmatpush1.msra.mxu0 %v1161
        %v1163 = vand.u32 %v525, 4294901760
        %1164 = vmatprep.subr.mxu0 %v1163
        %v1165 = vand.u32 %v524, 4294901760
        %1166 = vmatpush1.msra.mxu0 %v1165
        %v1167 = vand.u32 %v523, 4294901760
        %1168 = vmatprep.subr.mxu0 %v1167
        %v1169 = vand.u32 %v522, 4294901760
        %1170 = vmatpush1.msra.mxu0 %v1169
        %v1171 = vand.u32 %v521, 4294901760
        %1172 = vmatprep.subr.mxu0 %v1171
        %v1173 = vand.u32 %v520, 4294901760
        %1174 = vmatpush1.msra.mxu0 %v1173
        %v1175 = vand.u32 %v519, 4294901760
        %1176 = vmatprep.subr.mxu0 %v1175
        %v1177 = vand.u32 %v518, 4294901760
        %1178 = vmatpush1.msra.mxu0 %v1177
        %1179 = vmatprep.subr.mxu0 0.0
        %1180 = vmatpush2.msra.mxu0 0.0
        %1181 = vmatprep.subr.mxu0 0.0
        %1182 = vmatpush2.msra.mxu0 0.0
        %1183 = vmatprep.subr.mxu0 0.0
        %1184 = vmatpush2.msra.mxu0 0.0
        %1185 = vmatprep.subr.mxu0 0.0
        %1186 = vmatpush2.msra.mxu0 0.0
        %1187 = vmatprep.subr.mxu0 0.0
        %1188 = vmatpush2.msra.mxu0 0.0
        %1189 = vmatprep.subr.mxu0 0.0
        %1190 = vmatpush2.msra.mxu0 0.0
        %1191 = vmatprep.subr.mxu0 0.0
        %1192 = vmatpush2.msra.mxu0 0.0
        %1193 = vmatprep.subr.mxu0 0.0
        %1194 = vmatpush2.msra.mxu0 0.0
        %1195 = vmatprep.subr.mxu0 0.0
        %1196 = vmatpush2.msra.mxu0 0.0
        %1197 = vmatprep.subr.mxu0 0.0
        %1198 = vmatpush2.msra.mxu0 0.0
        %1199 = vmatprep.subr.mxu0 0.0
        %1200 = vmatpush2.msra.mxu0 0.0
        %1201 = vmatprep.subr.mxu0 0.0
        %1202 = vmatpush2.msra.mxu0 0.0
        %1203 = vmatprep.subr.mxu0 0.0
        %1204 = vmatpush2.msra.mxu0 0.0
        %1205 = vmatprep.subr.mxu0 0.0
        %1206 = vmatpush2.msra.mxu0 0.0
        %1207 = vmatprep.subr.mxu0 0.0
        %1208 = vmatpush2.msra.mxu0 0.0
        %1209 = vmatprep.subr.mxu0 0.0
        %1210 = vmatpush2.msra.mxu0 0.0
        %1211 = vmatprep.mubr.f32.mxu0 0.0
        %v1212 = vand.u32 %v544, 4294901760
        %1213 = vmatmul.mubr.f32.gmra.mxu0 %v1212
        %v1214 = vpop.f32.mrf.mxu0
        %v1215 = vadd.f32 %v1125, %v1214
        %v1216 = vpop.f32.mrf.mxu0
        %v1217 = vadd.f32 %v1127, %v1216
        %1218 = vdwg.mxu0
        %1219 = vst [vmem:[%s268] sm:$0xff] %v1215
        %1220 = vst [vmem:[%s268 + $0x8] sm:$0xff] %v1217
        %s1221 = sand.u32 %s143, 1
        %s1222 = scalar_lea.sflag [#allocation5], %s1221
        %s1223 = sand.u32 %s143, 1
        %s1224 = smul.addr %s1223, 16
        %s1225 = scalar_lea.vmem [#allocation8], %s1224
        // Predicated region
        $region45: #{tpu_custom_call.1} parent=35 // pred_check
          %p1226 = pneg %p153
        $region46: #{tpu_custom_call.1} parent=35 // pred_check_branch
          %1228 = sbr.rel (%p1226) target = $region48
        $region47: #{tpu_custom_call.1} parent=35 // pred_region
          %s1230 = ssub.s32 256, 256
          %1231 = vsyncadd %s1222, %s1230
          %s1232 = smul.addr %s27, 2
          %s1233 = smul.addr %s26, 2
          %s1234 = sadd.s32 %s1232, %s1233
          %s1235 = smul.addr %s1234, 128
          %s1236 = scalar_lea.hbm %s4, %s1235
          %s1238 = sshll.u32 %s1225, 4
          %s1239 = int_to_ptr.vmem [resolvable:$true] %s1238
          %1241 = dma.vmem_to_hbm [thread:$0]  %s1239, 256, %s1236, %s1222
        $region48: #{tpu_custom_call.1} parent=35 // pred_fallthru
          _
      $region36: #{tpu_custom_call.1} parent=5 // pred_fallthru
        _
      %p1242 = scmp.le.s32.totalorder 2, %s17
      // Predicated region
      $region49: #{tpu_custom_call.1} parent=5 // pred_check
        %p1243 = pneg %p1242
      $region50: #{tpu_custom_call.1} parent=5 // pred_check_branch
        %1245 = sbr.rel (%p1243) target = $region52
      $region51: #{tpu_custom_call.1} parent=5 // pred_region
        %s1246 = ssub.s32 %s17, 2
        // Predicated region
        $region53: #{tpu_custom_call.1} parent=51 // pred_check
          %p1247 = pneg %p159
        $region54: #{tpu_custom_call.1} parent=51 // pred_check_branch
          %1249 = sbr.rel (%p1247) target = $region56
        $region55: #{tpu_custom_call.1} parent=51 // pred_region
          %s1250 = sand.u32 %s144, 1
          %s1251 = scalar_lea.sflag [#allocation5], %s1250
          %s1252 = sand.u32 %s144, 1
          %s1253 = smul.addr %s1252, 16
          %s1254 = scalar_lea.vmem [#allocation8], %s1253
          %1255 = dma.done %s1251, 256
        $region56: #{tpu_custom_call.1} parent=51 // pred_fallthru
          _
      $region52: #{tpu_custom_call.1} parent=5 // pred_fallthru
        _
    $region6: #{tpu_custom_call.1} parent=1 // loop_footer
      %s21 = sadd.s32 1, %s17
    $region7: #{tpu_custom_call.1} parent=1 // loop_footer_branch
      %16 = sbr.rel target = $region3
    $region8: #{tpu_custom_call.1} parent=1 // loop_exit
      _
    %1256 = vsyncpa [#allocation4], 1
    %s1257 = scalar_lea.sflag [#allocation4], 1
    %1258 = vsyncpa %s1257, 1
    %1259 = vsyncpa [#allocation7], 1
    %1260 = vsyncpa [#allocation5], 1
    %s1261 = scalar_lea.sflag [#allocation5], 1
    %1262 = vsyncpa %s1261, 1

</llo_original>
